<compile_context>
chip_gen: v7x
topology: tpu7x:2x2x1
jax: 0.10.0
libtpu: 0.0.40
codegen_flags: <defaults>
</compile_context>

<pallas_src>
import jax
import jax.numpy as jnp
from jax import lax
from jax.experimental import pallas as pl
from jax.experimental.pallas import tpu as pltpu

# ----------------------------- config ---------------------------------------
VOCAB = 256
HIDDEN = 128
N_LAYERS = 2
N_HEADS = 4
HEAD_DIM = HIDDEN // N_HEADS          # 32
INTERMEDIATE = 256
RMS_EPS = 1e-5
ROPE_THETA = 10000.0
TARGET_LAYER = 1                      # this layer's weights are zeroed
PARAM_DTYPE = jnp.bfloat16
NEG_INF = -1e9                        # additive mask value (scores are f32)


# -------------------- fully fused forward kernel -----------------------------
def _fwd_kernel(h0_ref, bias_ref, cos_ref, sin_ref, fnorm_ref, lmh_ref,
                ln1_ref, wbig_ref, wo_ref, ln2_ref, wgu_ref, wdown_ref,
                o_ref, h_scr):
    """One grid step == one decoder layer over the full flattened batch.

    h0_ref   : (M, H)        bf16   embeddings (M = B*S)
    bias_ref : (M, M)        f32    additive attn bias (same-batch&causal&valid)
    cos/sin  : (M, H)        f32    RoPE tables, head-tiled & batch-tiled
    fnorm    : (1, H)        bf16   final RMSNorm weight
    lmh      : (H, V)        bf16   lm_head, pre-transposed
    ln1/ln2  : (1, 1, H)     bf16   this layer's RMSNorm weights
    wbig     : (1, H, 5H)    bf16   [Wq | Wk | Wv | rot(Wq) | rot(Wk)]^T
    wo       : (1, H, H)     bf16   o_proj, pre-transposed
    wgu      : (1, H, 2I)    bf16   [W_gate | W_up]^T
    wdown    : (1, I, H)     bf16   down_proj, pre-transposed
    o_ref    : (M, V)        f32    logits (written only at the last layer)
    h_scr    : (M, H)        bf16   hidden-state carry across layers (VMEM)
    """
    l = pl.program_id(0)
    H = HIDDEN

    @pl.when(l == 0)
    def _():
        h_scr[...] = h0_ref[...]

    x = h_scr[...]                                       # (M, H) bf16

    def rms(t_bf16, w):
        tf = t_bf16.astype(jnp.float32)
        var = jnp.mean(tf * tf, axis=-1, keepdims=True)
        # HF LlamaRMSNorm: cast back to input dtype, then scale by weight.
        return (tf * lax.rsqrt(var + RMS_EPS)).astype(jnp.bfloat16) * w

    # ---------------- self attention ----------------
    n1 = rms(x, ln1_ref[0])                              # (M, H) bf16
    # One matmul produces q, k, v AND the rotate_half'ed q, k (weight-folded).
    big = jnp.dot(n1, wbig_ref[0],
                  preferred_element_type=jnp.float32)    # (M, 5H) f32

    cosf = cos_ref[...]
    sinf = sin_ref[...]
    q = (big[:, 0:H] * cosf + big[:, 3 * H:4 * H] * sinf).astype(jnp.bfloat16)
    k = (big[:, H:2 * H] * cosf + big[:, 4 * H:5 * H] * sinf).astype(jnp.bfloat16)
    v = big[:, 2 * H:3 * H].astype(jnp.bfloat16)

    bias = bias_ref[...]                                 # (M, M) f32
    scale = 1.0 / (HEAD_DIM ** 0.5)
    wo = wo_ref[0]                                       # (H, H) bf16

    attn = jnp.zeros((x.shape[0], H), jnp.float32)
    for hh in range(N_HEADS):                            # static unroll (NH=4)
        lo = hh * HEAD_DIM
        q_h = q[:, lo:lo + HEAD_DIM]
        k_h = k[:, lo:lo + HEAD_DIM]
        v_h = v[:, lo:lo + HEAD_DIM]
        # Full (M, M) scores; cross-batch / non-causal / padded-key entries are
        # knocked out by the additive bias (block-diagonal in batch).
        s = lax.dot_general(q_h, k_h, (((1,), (1,)), ((), ())),
                            preferred_element_type=jnp.float32) * scale + bias
        m = jnp.max(s, axis=-1, keepdims=True)
        p = jnp.exp(s - m)
        denom = jnp.sum(p, axis=-1, keepdims=True)
        p = p * pl.reciprocal(denom, approx=True)        # EUP slot, ~free
        ctx = jnp.dot(p.astype(jnp.bfloat16), v_h,
                      preferred_element_type=jnp.float32)
        # Accumulate this head's o_proj contribution (no concat).
        attn = attn + jnp.dot(ctx.astype(jnp.bfloat16), wo[lo:lo + HEAD_DIM, :],
                              preferred_element_type=jnp.float32)

    h1 = x + attn.astype(jnp.bfloat16)                   # residual (bf16)

    # ---------------- MLP (SwiGLU) ----------------
    n2 = rms(h1, ln2_ref[0])
    gu = jnp.dot(n2, wgu_ref[0],
                 preferred_element_type=jnp.float32)     # (M, 2I) f32
    g = gu[:, :INTERMEDIATE]
    u = gu[:, INTERMEDIATE:]
    act = (g * pl.reciprocal(1.0 + jnp.exp(-g), approx=True) * u
           ).astype(jnp.bfloat16)
    mlp = jnp.dot(act, wdown_ref[0],
                  preferred_element_type=jnp.float32)
    h2 = h1 + mlp.astype(jnp.bfloat16)                   # residual (bf16)

    h_scr[...] = h2

    # ---------------- final RMSNorm + lm_head (last layer only) -------------
    @pl.when(l == pl.num_programs(0) - 1)
    def _():
        nf = rms(h2, fnorm_ref[...])
        o_ref[...] = jnp.dot(nf, lmh_ref[...],
                             preferred_element_type=jnp.float32)


def fused_forward(params, h0, bias, cosf, sinf):
    """h0: (M, H) bf16, bias: (M, M) f32, cos/sin: (M, H) f32 -> (M, V) f32."""
    M, H = h0.shape
    V = params["lm_head_t"].shape[1]
    return pl.pallas_call(
        _fwd_kernel,
        out_shape=jax.ShapeDtypeStruct((M, V), jnp.float32),
        grid=(N_LAYERS,),
        in_specs=[
            pl.BlockSpec((M, H), lambda l: (0, 0)),                       # h0
            pl.BlockSpec((M, M), lambda l: (0, 0)),                       # bias
            pl.BlockSpec((M, H), lambda l: (0, 0)),                       # cos
            pl.BlockSpec((M, H), lambda l: (0, 0)),                       # sin
            pl.BlockSpec((1, H), lambda l: (0, 0)),                       # fnorm
            pl.BlockSpec((H, V), lambda l: (0, 0)),                       # lm_head
            pl.BlockSpec((1, 1, H), lambda l: (l, 0, 0)),                 # ln1
            pl.BlockSpec((1, H, 5 * H), lambda l: (l, 0, 0)),             # wbig
            pl.BlockSpec((1, H, H), lambda l: (l, 0, 0)),                 # wo
            pl.BlockSpec((1, 1, H), lambda l: (l, 0, 0)),                 # ln2
            pl.BlockSpec((1, H, 2 * INTERMEDIATE), lambda l: (l, 0, 0)),  # wgu
            pl.BlockSpec((1, INTERMEDIATE, H), lambda l: (l, 0, 0)),      # wdown
        ],
        out_specs=pl.BlockSpec((M, V), lambda l: (0, 0)),
        scratch_shapes=[pltpu.VMEM((M, H), jnp.bfloat16)],
        compiler_params=pltpu.CompilerParams(
            # Layer axis carries the hidden state -> sequential.
            dimension_semantics=("arbitrary",)),
    )(h0, bias, cosf, sinf, params["final_norm"], params["lm_head_t"],
      params["ln1"], params["wbig"], params["wo"], params["ln2"],
      params["wgu"], params["wdown"])


# ----------------------------- RoPE tables (tiny, plain JAX) -----------------
def rope_tables(seq_len, head_dim, theta=ROPE_THETA):
    inv_freq = 1.0 / (theta ** (jnp.arange(0, head_dim, 2, dtype=jnp.float32)
                                / head_dim))
    pos = jnp.arange(seq_len, dtype=jnp.float32)
    freqs = pos[:, None] * inv_freq[None, :]             # (S, hd/2)
    emb = jnp.concatenate([freqs, freqs], axis=-1)       # (S, hd)
    return jnp.cos(emb), jnp.sin(emb)


def attention_bias(attention_mask):
    """(B, S) {0,1} -> (B*S, B*S) f32 additive bias: same-batch & causal & valid."""
    B, S = attention_mask.shape
    pos = jnp.arange(S, dtype=jnp.int32)
    bidx = jnp.arange(B, dtype=jnp.int32)
    flat_b = jnp.repeat(bidx, S)                          # (M,)
    flat_s = jnp.tile(pos, B)                             # (M,)
    same = flat_b[:, None] == flat_b[None, :]
    causal = flat_s[None, :] <= flat_s[:, None]
    valid = attention_mask.reshape(-1)[None, :] > 0
    allowed = same & causal & valid
    return jnp.where(allowed, 0.0, NEG_INF).astype(jnp.float32)


# ----------------------------- parameters ------------------------------------
def init_params(key):
    def w(k, shape):
        return (0.02 * jax.random.normal(k, shape, dtype=jnp.float32)
                ).astype(PARAM_DTYPE)

    half = HEAD_DIM // 2

    def fold_rot(w_t):
        # Column-permute/negate so that  x @ fold_rot(W) == rotate_half(x @ W).
        w3 = w_t.reshape(HIDDEN, N_HEADS, HEAD_DIM)
        rot = jnp.concatenate([-w3[..., half:], w3[..., :half]], axis=-1)
        return rot.reshape(HIDDEN, HIDDEN)

    keys = jax.random.split(key, 3 + N_LAYERS)
    params = {
        "embed": w(keys[0], (VOCAB, HIDDEN)),
        "final_norm": jnp.ones((1, HIDDEN), PARAM_DTYPE),
        # torch Linear stores (out, in); pre-transpose ONCE here.
        "lm_head_t": w(keys[1], (VOCAB, HIDDEN)).T,        # (H, V)
    }
    ln1s, ln2s, wbigs, wos, wgus, wdowns = [], [], [], [], [], []
    for li in range(N_LAYERS):
        lk = jax.random.split(keys[3 + li], 7)
        wqT = w(lk[0], (HIDDEN, HIDDEN)).T
        wkT = w(lk[1], (HIDDEN, HIDDEN)).T
        wvT = w(lk[2], (HIDDEN, HIDDEN)).T
        woT = w(lk[3], (HIDDEN, HIDDEN)).T
        wgT = w(lk[4], (INTERMEDIATE, HIDDEN)).T
        wuT = w(lk[5], (INTERMEDIATE, HIDDEN)).T
        wdT = w(lk[6], (HIDDEN, INTERMEDIATE)).T
        ln1 = jnp.ones((1, HIDDEN), PARAM_DTYPE)
        ln2 = jnp.ones((1, HIDDEN), PARAM_DTYPE)
        # Fused projection with rotate_half folded into the weights.
        wbig = jnp.concatenate([wqT, wkT, wvT, fold_rot(wqT), fold_rot(wkT)],
                               axis=1)                     # (H, 5H)
        wgu = jnp.concatenate([wgT, wuT], axis=1)          # (H, 2I)
        if li == TARGET_LAYER:
            # LlamaLayerTrainer zeroes every weight of the target layer
            # (including its RMSNorm weights).
            ln1, ln2 = jnp.zeros_like(ln1), jnp.zeros_like(ln2)
            wbig, woT = jnp.zeros_like(wbig), jnp.zeros_like(woT)
            wgu, wdT = jnp.zeros_like(wgu), jnp.zeros_like(wdT)
        ln1s.append(ln1)
        ln2s.append(ln2)
        wbigs.append(wbig)
        wos.append(woT)
        wgus.append(wgu)
        wdowns.append(wdT)
    params.update({
        "ln1": jnp.stack(ln1s),        # (L, 1, H)
        "ln2": jnp.stack(ln2s),        # (L, 1, H)
        "wbig": jnp.stack(wbigs),      # (L, H, 5H)
        "wo": jnp.stack(wos),          # (L, H, H)
        "wgu": jnp.stack(wgus),        # (L, H, 2I)
        "wdown": jnp.stack(wdowns),    # (L, I, H)
    })
    return params


# ----------------------------- model forward ---------------------------------
def llama_forward(params, input_ids, attention_mask):
    B, S = input_ids.shape
    M = B * S
    # Embedding gather left to XLA (no clean BlockSpec equivalent).
    h0 = params["embed"][input_ids].reshape(M, HIDDEN)    # (M, H) bf16

    cos, sin = rope_tables(S, HEAD_DIM)                   # (S, hd) f32
    cosf = jnp.tile(jnp.tile(cos, (1, N_HEADS)), (B, 1))  # (M, H) f32
    sinf = jnp.tile(jnp.tile(sin, (1, N_HEADS)), (B, 1))  # (M, H) f32
    bias = attention_bias(attention_mask.astype(jnp.int32))  # (M, M) f32

    logits = fused_forward(params, h0, bias, cosf, sinf)  # (M, V) f32
    return logits.reshape(B, S, VOCAB)


# ----------------------------- main -------------------------------------------
if __name__ == "__main__":
    B, S = 2, 8
    key = jax.random.PRNGKey(0)
    pkey, ikey = jax.random.split(key)

    params = init_params(pkey)
    input_ids = jax.random.randint(ikey, (B, S), 0, VOCAB, dtype=jnp.int32)
    # second sequence has two padding positions at the end
    attention_mask = jnp.array(
        [[1, 1, 1, 1, 1, 1, 1, 1],
         [1, 1, 1, 1, 1, 1, 0, 0]], dtype=jnp.int32
    )

    logits = jax.jit(llama_forward)(params, input_ids, attention_mask)
    logits = jax.block_until_ready(logits)

    assert logits.shape == (B, S, VOCAB)
    assert logits.dtype == jnp.float32
    assert bool(jnp.all(jnp.isfinite(logits)))
    print("KERNEL_OK")
</pallas_src>

<mosaic_0001>
module attributes {stable_mosaic.version = 11 : i64} {
  func.func @_fwd_kernel(%arg0: i32, %arg1: memref<16x128xbf16, #tpu.memory_space<vmem>>, %arg2: memref<16x16xf32, #tpu.memory_space<vmem>>, %arg3: memref<16x128xf32, #tpu.memory_space<vmem>>, %arg4: memref<16x128xf32, #tpu.memory_space<vmem>>, %arg5: memref<1x128xbf16, #tpu.memory_space<vmem>>, %arg6: memref<128x256xbf16, #tpu.memory_space<vmem>>, %arg7: memref<1x1x128xbf16, #tpu.memory_space<vmem>>, %arg8: memref<1x128x640xbf16, #tpu.memory_space<vmem>>, %arg9: memref<1x128x128xbf16, #tpu.memory_space<vmem>>, %arg10: memref<1x1x128xbf16, #tpu.memory_space<vmem>>, %arg11: memref<1x128x512xbf16, #tpu.memory_space<vmem>>, %arg12: memref<1x256x128xbf16, #tpu.memory_space<vmem>>, %arg13: memref<16x256xf32, #tpu.memory_space<vmem>>, %arg14: memref<16x128xbf16, #tpu.memory_space<vmem>>) attributes {dimension_semantics = [#tpu.dimension_semantics<arbitrary>], iteration_bounds = array<i64: 2>, scalar_prefetch = 0 : i64, scratch_operands = 1 : i64, tpu.core_type = #tpu.core_type<tc>, window_params = [{pipeline_mode = #tpu.pipeline_mode<synchronous>, transform_indices = @transform_0, window_bounds = array<i64: 16, 128>}, {pipeline_mode = #tpu.pipeline_mode<synchronous>, transform_indices = @transform_1, window_bounds = array<i64: 16, 16>}, {pipeline_mode = #tpu.pipeline_mode<synchronous>, transform_indices = @transform_2, window_bounds = array<i64: 16, 128>}, {pipeline_mode = #tpu.pipeline_mode<synchronous>, transform_indices = @transform_3, window_bounds = array<i64: 16, 128>}, {pipeline_mode = #tpu.pipeline_mode<synchronous>, transform_indices = @transform_4, window_bounds = array<i64: 1, 128>}, {pipeline_mode = #tpu.pipeline_mode<synchronous>, transform_indices = @transform_5, window_bounds = array<i64: 128, 256>}, {transform_indices = @transform_6, window_bounds = array<i64: 1, 1, 128>}, {transform_indices = @transform_7, window_bounds = array<i64: 1, 128, 640>}, {transform_indices = @transform_8, window_bounds = array<i64: 1, 128, 128>}, {transform_indices = @transform_9, window_bounds = array<i64: 1, 1, 128>}, {transform_indices = @transform_10, window_bounds = array<i64: 1, 128, 512>}, {transform_indices = @transform_11, window_bounds = array<i64: 1, 256, 128>}, {pipeline_mode = #tpu.pipeline_mode<synchronous>, transform_indices = @transform_12, window_bounds = array<i64: 16, 256>}]} {
    %c0_i32 = arith.constant 0 : i32
    %0 = arith.cmpi eq, %arg0, %c0_i32 : i32
    %1 = arith.extui %0 : i1 to i32
    %c0_i32_0 = arith.constant 0 : i32
    %2 = arith.cmpi ne, %1, %c0_i32_0 : i32
    scf.if %2 {
      %c0_64 = arith.constant 0 : index
      %c0_65 = arith.constant 0 : index
      %176 = vector.load %arg1[%c0_64, %c0_65] : memref<16x128xbf16, #tpu.memory_space<vmem>>, vector<16x128xbf16>
      %c0_66 = arith.constant 0 : index
      %c0_67 = arith.constant 0 : index
      %177 = vector.load %arg14[%c0_66, %c0_67] : memref<16x128xbf16, #tpu.memory_space<vmem>>, vector<16x128xbf16>
      tpu.vector_store %arg14[%c0_66, %c0_67], %176 {strides = array<i32>} : memref<16x128xbf16, #tpu.memory_space<vmem>>, vector<16x128xbf16>,
    } else {
    }
    %c0 = arith.constant 0 : index
    %c0_1 = arith.constant 0 : index
    %3 = vector.load %arg14[%c0, %c0_1] : memref<16x128xbf16, #tpu.memory_space<vmem>>, vector<16x128xbf16>
    %c0_2 = arith.constant 0 : index
    %c0_3 = arith.constant 0 : index
    %c0_4 = arith.constant 0 : index
    %4 = vector.load %arg7[%c0_2, %c0_3, %c0_4] : memref<1x1x128xbf16, #tpu.memory_space<vmem>>, vector<1x1x128xbf16>
    %5 = vector.shape_cast %4 : vector<1x1x128xbf16> to vector<1x128xbf16>
    %6 = arith.extf %3 : vector<16x128xbf16> to vector<16x128xf32>
    %7 = arith.mulf %6, %6 : vector<16x128xf32>
    %cst = arith.constant dense<0.000000e+00> : vector<16xf32>
    %8 = vector.multi_reduction <add>, %7, %cst [1] : vector<16x128xf32> to vector<16xf32>
    %9 = vector.shape_cast %8 : vector<16xf32> to vector<16x1xf32>
    %cst_5 = arith.constant 1.280000e+02 : f32
    %10 = vector.broadcast %cst_5 : f32 to vector<16x1xf32>
    %11 = arith.divf %9, %10 : vector<16x1xf32>
    %cst_6 = arith.constant 9.99999974E-6 : f32
    %12 = vector.broadcast %cst_6 : f32 to vector<16x1xf32>
    %13 = arith.addf %11, %12 : vector<16x1xf32>
    %14 = math.rsqrt %13 : vector<16x1xf32>
    %15 = vector.broadcast %14 : vector<16x1xf32> to vector<16x128xf32>
    %16 = arith.mulf %6, %15 : vector<16x128xf32>
    %17 = arith.truncf %16 : vector<16x128xf32> to vector<16x128xbf16>
    %18 = vector.broadcast %5 : vector<1x128xbf16> to vector<16x128xbf16>
    %19 = arith.mulf %17, %18 : vector<16x128xbf16>
    %c0_7 = arith.constant 0 : index
    %c0_8 = arith.constant 0 : index
    %c0_9 = arith.constant 0 : index
    %20 = vector.load %arg8[%c0_7, %c0_8, %c0_9] : memref<1x128x640xbf16, #tpu.memory_space<vmem>>, vector<1x128x640xbf16>
    %21 = vector.shape_cast %20 : vector<1x128x640xbf16> to vector<128x640xbf16>
    %cst_10 = arith.constant dense<0.000000e+00> : vector<16x640xf32>
    %22 = tpu.matmul %19, %21, %cst_10 {dimension_numbers = #tpu.dot_dimension_numbers<[1], [0], [0], [1], [0, 0, 1, 1], [], []>} : vector<16x128xbf16>, vector<128x640xbf16>, vector<16x640xf32> -> vector<16x640xf32>
    %c0_11 = arith.constant 0 : index
    %c0_12 = arith.constant 0 : index
    %23 = vector.load %arg3[%c0_11, %c0_12] : memref<16x128xf32, #tpu.memory_space<vmem>>, vector<16x128xf32>
    %c0_13 = arith.constant 0 : index
    %c0_14 = arith.constant 0 : index
    %24 = vector.load %arg4[%c0_13, %c0_14] : memref<16x128xf32, #tpu.memory_space<vmem>>, vector<16x128xf32>
    %25 = vector.extract_strided_slice %22 {offsets = [0, 0], sizes = [16, 128], strides = [1, 1]} : vector<16x640xf32> to vector<16x128xf32>
    %26 = arith.mulf %25, %23 : vector<16x128xf32>
    %27 = vector.extract_strided_slice %22 {offsets = [0, 384], sizes = [16, 128], strides = [1, 1]} : vector<16x640xf32> to vector<16x128xf32>
    %28 = arith.mulf %27, %24 : vector<16x128xf32>
    %29 = arith.addf %26, %28 : vector<16x128xf32>
    %30 = arith.truncf %29 : vector<16x128xf32> to vector<16x128xbf16>
    %31 = vector.extract_strided_slice %22 {offsets = [0, 128], sizes = [16, 128], strides = [1, 1]} : vector<16x640xf32> to vector<16x128xf32>
    %32 = arith.mulf %31, %23 : vector<16x128xf32>
    %33 = vector.extract_strided_slice %22 {offsets = [0, 512], sizes = [16, 128], strides = [1, 1]} : vector<16x640xf32> to vector<16x128xf32>
    %34 = arith.mulf %33, %24 : vector<16x128xf32>
    %35 = arith.addf %32, %34 : vector<16x128xf32>
    %36 = arith.truncf %35 : vector<16x128xf32> to vector<16x128xbf16>
    %37 = vector.extract_strided_slice %22 {offsets = [0, 256], sizes = [16, 128], strides = [1, 1]} : vector<16x640xf32> to vector<16x128xf32>
    %38 = arith.truncf %37 : vector<16x128xf32> to vector<16x128xbf16>
    %c0_15 = arith.constant 0 : index
    %c0_16 = arith.constant 0 : index
    %39 = vector.load %arg2[%c0_15, %c0_16] : memref<16x16xf32, #tpu.memory_space<vmem>>, vector<16x16xf32>
    %c0_17 = arith.constant 0 : index
    %c0_18 = arith.constant 0 : index
    %c0_19 = arith.constant 0 : index
    %40 = vector.load %arg9[%c0_17, %c0_18, %c0_19] : memref<1x128x128xbf16, #tpu.memory_space<vmem>>, vector<1x128x128xbf16>
    %41 = vector.shape_cast %40 : vector<1x128x128xbf16> to vector<128x128xbf16>
    %cst_20 = arith.constant 0.000000e+00 : f32
    %42 = vector.broadcast %cst_20 : f32 to vector<16x128xf32>
    %43 = vector.extract_strided_slice %30 {offsets = [0, 0], sizes = [16, 32], strides = [1, 1]} : vector<16x128xbf16> to vector<16x32xbf16>
    %44 = vector.extract_strided_slice %36 {offsets = [0, 0], sizes = [16, 32], strides = [1, 1]} : vector<16x128xbf16> to vector<16x32xbf16>
    %45 = vector.extract_strided_slice %38 {offsets = [0, 0], sizes = [16, 32], strides = [1, 1]} : vector<16x128xbf16> to vector<16x32xbf16>
    %cst_21 = arith.constant dense<0.000000e+00> : vector<16x16xf32>
    %46 = tpu.matmul %43, %44, %cst_21 {dimension_numbers = #tpu.dot_dimension_numbers<[1], [1], [0], [0], [0, 0, 1, 0], [], []>} : vector<16x32xbf16>, vector<16x32xbf16>, vector<16x16xf32> -> vector<16x16xf32>
    %cst_22 = arith.constant 0.176776692 : f32
    %47 = vector.broadcast %cst_22 : f32 to vector<16x16xf32>
    %48 = arith.mulf %46, %47 : vector<16x16xf32>
    %49 = arith.addf %48, %39 : vector<16x16xf32>
    %cst_23 = arith.constant dense<0xFF800000> : vector<16xf32>
    %50 = vector.multi_reduction <maximumf>, %49, %cst_23 [1] : vector<16x16xf32> to vector<16xf32>
    %51 = vector.shape_cast %50 : vector<16xf32> to vector<16x1xf32>
    %52 = vector.broadcast %51 : vector<16x1xf32> to vector<16x16xf32>
    %53 = arith.subf %49, %52 : vector<16x16xf32>
    %54 = math.exp %53 : vector<16x16xf32>
    %cst_24 = arith.constant dense<0.000000e+00> : vector<16xf32>
    %55 = vector.multi_reduction <add>, %54, %cst_24 [1] : vector<16x16xf32> to vector<16xf32>
    %56 = vector.shape_cast %55 : vector<16xf32> to vector<16x1xf32>
    %57 = tpu.reciprocal %56 {approx = true} : vector<16x1xf32> -> vector<16x1xf32>
    %58 = vector.broadcast %57 : vector<16x1xf32> to vector<16x16xf32>
    %59 = arith.mulf %54, %58 : vector<16x16xf32>
    %60 = arith.truncf %59 : vector<16x16xf32> to vector<16x16xbf16>
    %cst_25 = arith.constant dense<0.000000e+00> : vector<16x32xf32>
    %61 = tpu.matmul %60, %45, %cst_25 {dimension_numbers = #tpu.dot_dimension_numbers<[1], [0], [0], [1], [0, 0, 1, 1], [], []>} : vector<16x16xbf16>, vector<16x32xbf16>, vector<16x32xf32> -> vector<16x32xf32>
    %62 = arith.truncf %61 : vector<16x32xf32> to vector<16x32xbf16>
    %63 = vector.extract_strided_slice %41 {offsets = [0, 0], sizes = [32, 128], strides = [1, 1]} : vector<128x128xbf16> to vector<32x128xbf16>
    %cst_26 = arith.constant dense<0.000000e+00> : vector<16x128xf32>
    %64 = tpu.matmul %62, %63, %cst_26 {dimension_numbers = #tpu.dot_dimension_numbers<[1], [0], [0], [1], [0, 0, 1, 1], [], []>} : vector<16x32xbf16>, vector<32x128xbf16>, vector<16x128xf32> -> vector<16x128xf32>
    %65 = arith.addf %42, %64 : vector<16x128xf32>
    %66 = vector.extract_strided_slice %30 {offsets = [0, 32], sizes = [16, 32], strides = [1, 1]} : vector<16x128xbf16> to vector<16x32xbf16>
    %67 = vector.extract_strided_slice %36 {offsets = [0, 32], sizes = [16, 32], strides = [1, 1]} : vector<16x128xbf16> to vector<16x32xbf16>
    %68 = vector.extract_strided_slice %38 {offsets = [0, 32], sizes = [16, 32], strides = [1, 1]} : vector<16x128xbf16> to vector<16x32xbf16>
    %cst_27 = arith.constant dense<0.000000e+00> : vector<16x16xf32>
    %69 = tpu.matmul %66, %67, %cst_27 {dimension_numbers = #tpu.dot_dimension_numbers<[1], [1], [0], [0], [0, 0, 1, 0], [], []>} : vector<16x32xbf16>, vector<16x32xbf16>, vector<16x16xf32> -> vector<16x16xf32>
    %cst_28 = arith.constant 0.176776692 : f32
    %70 = vector.broadcast %cst_28 : f32 to vector<16x16xf32>
    %71 = arith.mulf %69, %70 : vector<16x16xf32>
    %72 = arith.addf %71, %39 : vector<16x16xf32>
    %cst_29 = arith.constant dense<0xFF800000> : vector<16xf32>
    %73 = vector.multi_reduction <maximumf>, %72, %cst_29 [1] : vector<16x16xf32> to vector<16xf32>
    %74 = vector.shape_cast %73 : vector<16xf32> to vector<16x1xf32>
    %75 = vector.broadcast %74 : vector<16x1xf32> to vector<16x16xf32>
    %76 = arith.subf %72, %75 : vector<16x16xf32>
    %77 = math.exp %76 : vector<16x16xf32>
    %cst_30 = arith.constant dense<0.000000e+00> : vector<16xf32>
    %78 = vector.multi_reduction <add>, %77, %cst_30 [1] : vector<16x16xf32> to vector<16xf32>
    %79 = vector.shape_cast %78 : vector<16xf32> to vector<16x1xf32>
    %80 = tpu.reciprocal %79 {approx = true} : vector<16x1xf32> -> vector<16x1xf32>
    %81 = vector.broadcast %80 : vector<16x1xf32> to vector<16x16xf32>
    %82 = arith.mulf %77, %81 : vector<16x16xf32>
    %83 = arith.truncf %82 : vector<16x16xf32> to vector<16x16xbf16>
    %cst_31 = arith.constant dense<0.000000e+00> : vector<16x32xf32>
    %84 = tpu.matmul %83, %68, %cst_31 {dimension_numbers = #tpu.dot_dimension_numbers<[1], [0], [0], [1], [0, 0, 1, 1], [], []>} : vector<16x16xbf16>, vector<16x32xbf16>, vector<16x32xf32> -> vector<16x32xf32>
    %85 = arith.truncf %84 : vector<16x32xf32> to vector<16x32xbf16>
    %86 = vector.extract_strided_slice %41 {offsets = [32, 0], sizes = [32, 128], strides = [1, 1]} : vector<128x128xbf16> to vector<32x128xbf16>
    %cst_32 = arith.constant dense<0.000000e+00> : vector<16x128xf32>
    %87 = tpu.matmul %85, %86, %cst_32 {dimension_numbers = #tpu.dot_dimension_numbers<[1], [0], [0], [1], [0, 0, 1, 1], [], []>} : vector<16x32xbf16>, vector<32x128xbf16>, vector<16x128xf32> -> vector<16x128xf32>
    %88 = arith.addf %65, %87 : vector<16x128xf32>
    %89 = vector.extract_strided_slice %30 {offsets = [0, 64], sizes = [16, 32], strides = [1, 1]} : vector<16x128xbf16> to vector<16x32xbf16>
    %90 = vector.extract_strided_slice %36 {offsets = [0, 64], sizes = [16, 32], strides = [1, 1]} : vector<16x128xbf16> to vector<16x32xbf16>
    %91 = vector.extract_strided_slice %38 {offsets = [0, 64], sizes = [16, 32], strides = [1, 1]} : vector<16x128xbf16> to vector<16x32xbf16>
    %cst_33 = arith.constant dense<0.000000e+00> : vector<16x16xf32>
    %92 = tpu.matmul %89, %90, %cst_33 {dimension_numbers = #tpu.dot_dimension_numbers<[1], [1], [0], [0], [0, 0, 1, 0], [], []>} : vector<16x32xbf16>, vector<16x32xbf16>, vector<16x16xf32> -> vector<16x16xf32>
    %cst_34 = arith.constant 0.176776692 : f32
    %93 = vector.broadcast %cst_34 : f32 to vector<16x16xf32>
    %94 = arith.mulf %92, %93 : vector<16x16xf32>
    %95 = arith.addf %94, %39 : vector<16x16xf32>
    %cst_35 = arith.constant dense<0xFF800000> : vector<16xf32>
    %96 = vector.multi_reduction <maximumf>, %95, %cst_35 [1] : vector<16x16xf32> to vector<16xf32>
    %97 = vector.shape_cast %96 : vector<16xf32> to vector<16x1xf32>
    %98 = vector.broadcast %97 : vector<16x1xf32> to vector<16x16xf32>
    %99 = arith.subf %95, %98 : vector<16x16xf32>
    %100 = math.exp %99 : vector<16x16xf32>
    %cst_36 = arith.constant dense<0.000000e+00> : vector<16xf32>
    %101 = vector.multi_reduction <add>, %100, %cst_36 [1] : vector<16x16xf32> to vector<16xf32>
    %102 = vector.shape_cast %101 : vector<16xf32> to vector<16x1xf32>
    %103 = tpu.reciprocal %102 {approx = true} : vector<16x1xf32> -> vector<16x1xf32>
    %104 = vector.broadcast %103 : vector<16x1xf32> to vector<16x16xf32>
    %105 = arith.mulf %100, %104 : vector<16x16xf32>
    %106 = arith.truncf %105 : vector<16x16xf32> to vector<16x16xbf16>
    %cst_37 = arith.constant dense<0.000000e+00> : vector<16x32xf32>
    %107 = tpu.matmul %106, %91, %cst_37 {dimension_numbers = #tpu.dot_dimension_numbers<[1], [0], [0], [1], [0, 0, 1, 1], [], []>} : vector<16x16xbf16>, vector<16x32xbf16>, vector<16x32xf32> -> vector<16x32xf32>
    %108 = arith.truncf %107 : vector<16x32xf32> to vector<16x32xbf16>
    %109 = vector.extract_strided_slice %41 {offsets = [64, 0], sizes = [32, 128], strides = [1, 1]} : vector<128x128xbf16> to vector<32x128xbf16>
    %cst_38 = arith.constant dense<0.000000e+00> : vector<16x128xf32>
    %110 = tpu.matmul %108, %109, %cst_38 {dimension_numbers = #tpu.dot_dimension_numbers<[1], [0], [0], [1], [0, 0, 1, 1], [], []>} : vector<16x32xbf16>, vector<32x128xbf16>, vector<16x128xf32> -> vector<16x128xf32>
    %111 = arith.addf %88, %110 : vector<16x128xf32>
    %112 = vector.extract_strided_slice %30 {offsets = [0, 96], sizes = [16, 32], strides = [1, 1]} : vector<16x128xbf16> to vector<16x32xbf16>
    %113 = vector.extract_strided_slice %36 {offsets = [0, 96], sizes = [16, 32], strides = [1, 1]} : vector<16x128xbf16> to vector<16x32xbf16>
    %114 = vector.extract_strided_slice %38 {offsets = [0, 96], sizes = [16, 32], strides = [1, 1]} : vector<16x128xbf16> to vector<16x32xbf16>
    %cst_39 = arith.constant dense<0.000000e+00> : vector<16x16xf32>
    %115 = tpu.matmul %112, %113, %cst_39 {dimension_numbers = #tpu.dot_dimension_numbers<[1], [1], [0], [0], [0, 0, 1, 0], [], []>} : vector<16x32xbf16>, vector<16x32xbf16>, vector<16x16xf32> -> vector<16x16xf32>
    %cst_40 = arith.constant 0.176776692 : f32
    %116 = vector.broadcast %cst_40 : f32 to vector<16x16xf32>
    %117 = arith.mulf %115, %116 : vector<16x16xf32>
    %118 = arith.addf %117, %39 : vector<16x16xf32>
    %cst_41 = arith.constant dense<0xFF800000> : vector<16xf32>
    %119 = vector.multi_reduction <maximumf>, %118, %cst_41 [1] : vector<16x16xf32> to vector<16xf32>
    %120 = vector.shape_cast %119 : vector<16xf32> to vector<16x1xf32>
    %121 = vector.broadcast %120 : vector<16x1xf32> to vector<16x16xf32>
    %122 = arith.subf %118, %121 : vector<16x16xf32>
    %123 = math.exp %122 : vector<16x16xf32>
    %cst_42 = arith.constant dense<0.000000e+00> : vector<16xf32>
    %124 = vector.multi_reduction <add>, %123, %cst_42 [1] : vector<16x16xf32> to vector<16xf32>
    %125 = vector.shape_cast %124 : vector<16xf32> to vector<16x1xf32>
    %126 = tpu.reciprocal %125 {approx = true} : vector<16x1xf32> -> vector<16x1xf32>
    %127 = vector.broadcast %126 : vector<16x1xf32> to vector<16x16xf32>
    %128 = arith.mulf %123, %127 : vector<16x16xf32>
    %129 = arith.truncf %128 : vector<16x16xf32> to vector<16x16xbf16>
    %cst_43 = arith.constant dense<0.000000e+00> : vector<16x32xf32>
    %130 = tpu.matmul %129, %114, %cst_43 {dimension_numbers = #tpu.dot_dimension_numbers<[1], [0], [0], [1], [0, 0, 1, 1], [], []>} : vector<16x16xbf16>, vector<16x32xbf16>, vector<16x32xf32> -> vector<16x32xf32>
    %131 = arith.truncf %130 : vector<16x32xf32> to vector<16x32xbf16>
    %132 = vector.extract_strided_slice %41 {offsets = [96, 0], sizes = [32, 128], strides = [1, 1]} : vector<128x128xbf16> to vector<32x128xbf16>
    %cst_44 = arith.constant dense<0.000000e+00> : vector<16x128xf32>
    %133 = tpu.matmul %131, %132, %cst_44 {dimension_numbers = #tpu.dot_dimension_numbers<[1], [0], [0], [1], [0, 0, 1, 1], [], []>} : vector<16x32xbf16>, vector<32x128xbf16>, vector<16x128xf32> -> vector<16x128xf32>
    %134 = arith.addf %111, %133 : vector<16x128xf32>
    %135 = arith.truncf %134 : vector<16x128xf32> to vector<16x128xbf16>
    %136 = arith.addf %3, %135 : vector<16x128xbf16>
    %c0_45 = arith.constant 0 : index
    %c0_46 = arith.constant 0 : index
    %c0_47 = arith.constant 0 : index
    %137 = vector.load %arg10[%c0_45, %c0_46, %c0_47] : memref<1x1x128xbf16, #tpu.memory_space<vmem>>, vector<1x1x128xbf16>
    %138 = vector.shape_cast %137 : vector<1x1x128xbf16> to vector<1x128xbf16>
    %139 = arith.extf %136 : vector<16x128xbf16> to vector<16x128xf32>
    %140 = arith.mulf %139, %139 : vector<16x128xf32>
    %cst_48 = arith.constant dense<0.000000e+00> : vector<16xf32>
    %141 = vector.multi_reduction <add>, %140, %cst_48 [1] : vector<16x128xf32> to vector<16xf32>
    %142 = vector.shape_cast %141 : vector<16xf32> to vector<16x1xf32>
    %cst_49 = arith.constant 1.280000e+02 : f32
    %143 = vector.broadcast %cst_49 : f32 to vector<16x1xf32>
    %144 = arith.divf %142, %143 : vector<16x1xf32>
    %cst_50 = arith.constant 9.99999974E-6 : f32
    %145 = vector.broadcast %cst_50 : f32 to vector<16x1xf32>
    %146 = arith.addf %144, %145 : vector<16x1xf32>
    %147 = math.rsqrt %146 : vector<16x1xf32>
    %148 = vector.broadcast %147 : vector<16x1xf32> to vector<16x128xf32>
    %149 = arith.mulf %139, %148 : vector<16x128xf32>
    %150 = arith.truncf %149 : vector<16x128xf32> to vector<16x128xbf16>
    %151 = vector.broadcast %138 : vector<1x128xbf16> to vector<16x128xbf16>
    %152 = arith.mulf %150, %151 : vector<16x128xbf16>
    %c0_51 = arith.constant 0 : index
    %c0_52 = arith.constant 0 : index
    %c0_53 = arith.constant 0 : index
    %153 = vector.load %arg11[%c0_51, %c0_52, %c0_53] : memref<1x128x512xbf16, #tpu.memory_space<vmem>>, vector<1x128x512xbf16>
    %154 = vector.shape_cast %153 : vector<1x128x512xbf16> to vector<128x512xbf16>
    %cst_54 = arith.constant dense<0.000000e+00> : vector<16x512xf32>
    %155 = tpu.matmul %152, %154, %cst_54 {dimension_numbers = #tpu.dot_dimension_numbers<[1], [0], [0], [1], [0, 0, 1, 1], [], []>} : vector<16x128xbf16>, vector<128x512xbf16>, vector<16x512xf32> -> vector<16x512xf32>
    %156 = vector.extract_strided_slice %155 {offsets = [0, 0], sizes = [16, 256], strides = [1, 1]} : vector<16x512xf32> to vector<16x256xf32>
    %157 = vector.extract_strided_slice %155 {offsets = [0, 256], sizes = [16, 256], strides = [1, 1]} : vector<16x512xf32> to vector<16x256xf32>
    %cst_55 = arith.constant 0.000000e+00 : f32
    %158 = vector.broadcast %cst_55 : f32 to vector<16x256xf32>
    %159 = arith.subf %158, %156 : vector<16x256xf32>
    %160 = math.exp %159 : vector<16x256xf32>
    %cst_56 = arith.constant 1.000000e+00 : f32
    %161 = vector.broadcast %cst_56 : f32 to vector<16x256xf32>
    %162 = arith.addf %161, %160 : vector<16x256xf32>
    %163 = tpu.reciprocal %162 {approx = true} : vector<16x256xf32> -> vector<16x256xf32>
    %164 = arith.mulf %156, %163 : vector<16x256xf32>
    %165 = arith.mulf %164, %157 : vector<16x256xf32>
    %166 = arith.truncf %165 : vector<16x256xf32> to vector<16x256xbf16>
    %c0_57 = arith.constant 0 : index
    %c0_58 = arith.constant 0 : index
    %c0_59 = arith.constant 0 : index
    %167 = vector.load %arg12[%c0_57, %c0_58, %c0_59] : memref<1x256x128xbf16, #tpu.memory_space<vmem>>, vector<1x256x128xbf16>
    %168 = vector.shape_cast %167 : vector<1x256x128xbf16> to vector<256x128xbf16>
    %cst_60 = arith.constant dense<0.000000e+00> : vector<16x128xf32>
    %169 = tpu.matmul %166, %168, %cst_60 {dimension_numbers = #tpu.dot_dimension_numbers<[1], [0], [0], [1], [0, 0, 1, 1], [], []>} : vector<16x256xbf16>, vector<256x128xbf16>, vector<16x128xf32> -> vector<16x128xf32>
    %170 = arith.truncf %169 : vector<16x128xf32> to vector<16x128xbf16>
    %171 = arith.addf %136, %170 : vector<16x128xbf16>
    %c0_61 = arith.constant 0 : index
    %c0_62 = arith.constant 0 : index
    %172 = vector.load %arg14[%c0_61, %c0_62] : memref<16x128xbf16, #tpu.memory_space<vmem>>, vector<16x128xbf16>
    tpu.vector_store %arg14[%c0_61, %c0_62], %171 {strides = array<i32>} : memref<16x128xbf16, #tpu.memory_space<vmem>>, vector<16x128xbf16>,
    %c1_i32 = arith.constant 1 : i32
    %173 = arith.cmpi eq, %arg0, %c1_i32 : i32
    %174 = arith.extui %173 : i1 to i32
    %c0_i32_63 = arith.constant 0 : i32
    %175 = arith.cmpi ne, %174, %c0_i32_63 : i32
    scf.if %175 {
      %c0_64 = arith.constant 0 : index
      %c0_65 = arith.constant 0 : index
      %176 = vector.load %arg5[%c0_64, %c0_65] : memref<1x128xbf16, #tpu.memory_space<vmem>>, vector<1x128xbf16>
      %177 = arith.extf %171 : vector<16x128xbf16> to vector<16x128xf32>
      %178 = arith.mulf %177, %177 : vector<16x128xf32>
      %cst_66 = arith.constant dense<0.000000e+00> : vector<16xf32>
      %179 = vector.multi_reduction <add>, %178, %cst_66 [1] : vector<16x128xf32> to vector<16xf32>
      %180 = vector.shape_cast %179 : vector<16xf32> to vector<16x1xf32>
      %cst_67 = arith.constant 1.280000e+02 : f32
      %181 = vector.broadcast %cst_67 : f32 to vector<16x1xf32>
      %182 = arith.divf %180, %181 : vector<16x1xf32>
      %cst_68 = arith.constant 9.99999974E-6 : f32
      %183 = vector.broadcast %cst_68 : f32 to vector<16x1xf32>
      %184 = arith.addf %182, %183 : vector<16x1xf32>
      %185 = math.rsqrt %184 : vector<16x1xf32>
      %186 = vector.broadcast %185 : vector<16x1xf32> to vector<16x128xf32>
      %187 = arith.mulf %177, %186 : vector<16x128xf32>
      %188 = arith.truncf %187 : vector<16x128xf32> to vector<16x128xbf16>
      %189 = vector.broadcast %176 : vector<1x128xbf16> to vector<16x128xbf16>
      %190 = arith.mulf %188, %189 : vector<16x128xbf16>
      %c0_69 = arith.constant 0 : index
      %c0_70 = arith.constant 0 : index
      %191 = vector.load %arg6[%c0_69, %c0_70] : memref<128x256xbf16, #tpu.memory_space<vmem>>, vector<128x256xbf16>
      %cst_71 = arith.constant dense<0.000000e+00> : vector<16x256xf32>
      %192 = tpu.matmul %190, %191, %cst_71 {dimension_numbers = #tpu.dot_dimension_numbers<[1], [0], [0], [1], [0, 0, 1, 1], [], []>} : vector<16x128xbf16>, vector<128x256xbf16>, vector<16x256xf32> -> vector<16x256xf32>
      %c0_72 = arith.constant 0 : index
      %c0_73 = arith.constant 0 : index
      %193 = vector.load %arg13[%c0_72, %c0_73] : memref<16x256xf32, #tpu.memory_space<vmem>>, vector<16x256xf32>
      tpu.vector_store %arg13[%c0_72, %c0_73], %192 {strides = array<i32>} : memref<16x256xf32, #tpu.memory_space<vmem>>, vector<16x256xf32>,
    } else {
    }
    return
  }
  func.func @transform_0(%arg0: i32) -> (i32, i32) {
    %c0_i32 = arith.constant 0 : i32
    %c0_i32_0 = arith.constant 0 : i32
    %c0_i32_1 = arith.constant 0 : i32
    return %c0_i32, %c0_i32_0 : i32, i32
  }
  func.func @transform_1(%arg0: i32) -> (i32, i32) {
    %c0_i32 = arith.constant 0 : i32
    %c0_i32_0 = arith.constant 0 : i32
    %c0_i32_1 = arith.constant 0 : i32
    return %c0_i32, %c0_i32_0 : i32, i32
  }
  func.func @transform_2(%arg0: i32) -> (i32, i32) {
    %c0_i32 = arith.constant 0 : i32
    %c0_i32_0 = arith.constant 0 : i32
    %c0_i32_1 = arith.constant 0 : i32
    return %c0_i32, %c0_i32_0 : i32, i32
  }
  func.func @transform_3(%arg0: i32) -> (i32, i32) {
    %c0_i32 = arith.constant 0 : i32
    %c0_i32_0 = arith.constant 0 : i32
    %c0_i32_1 = arith.constant 0 : i32
    return %c0_i32, %c0_i32_0 : i32, i32
  }
  func.func @transform_4(%arg0: i32) -> (i32, i32) {
    %c0_i32 = arith.constant 0 : i32
    %c0_i32_0 = arith.constant 0 : i32
    %c0_i32_1 = arith.constant 0 : i32
    return %c0_i32, %c0_i32_0 : i32, i32
  }
  func.func @transform_5(%arg0: i32) -> (i32, i32) {
    %c0_i32 = arith.constant 0 : i32
    %c0_i32_0 = arith.constant 0 : i32
    %c0_i32_1 = arith.constant 0 : i32
    return %c0_i32, %c0_i32_0 : i32, i32
  }
  func.func @transform_6(%arg0: i32) -> (i32, i32, i32) {
    %c0_i32 = arith.constant 0 : i32
    %c0_i32_0 = arith.constant 0 : i32
    %c0_i32_1 = arith.constant 0 : i32
    return %arg0, %c0_i32, %c0_i32_0 : i32, i32, i32
  }
  func.func @transform_7(%arg0: i32) -> (i32, i32, i32) {
    %c0_i32 = arith.constant 0 : i32
    %c0_i32_0 = arith.constant 0 : i32
    %c0_i32_1 = arith.constant 0 : i32
    return %arg0, %c0_i32, %c0_i32_0 : i32, i32, i32
  }
  func.func @transform_8(%arg0: i32) -> (i32, i32, i32) {
    %c0_i32 = arith.constant 0 : i32
    %c0_i32_0 = arith.constant 0 : i32
    %c0_i32_1 = arith.constant 0 : i32
    return %arg0, %c0_i32, %c0_i32_0 : i32, i32, i32
  }
  func.func @transform_9(%arg0: i32) -> (i32, i32, i32) {
    %c0_i32 = arith.constant 0 : i32
    %c0_i32_0 = arith.constant 0 : i32
    %c0_i32_1 = arith.constant 0 : i32
    return %arg0, %c0_i32, %c0_i32_0 : i32, i32, i32
  }
  func.func @transform_10(%arg0: i32) -> (i32, i32, i32) {
    %c0_i32 = arith.constant 0 : i32
    %c0_i32_0 = arith.constant 0 : i32
    %c0_i32_1 = arith.constant 0 : i32
    return %arg0, %c0_i32, %c0_i32_0 : i32, i32, i32
  }
  func.func @transform_11(%arg0: i32) -> (i32, i32, i32) {
    %c0_i32 = arith.constant 0 : i32
    %c0_i32_0 = arith.constant 0 : i32
    %c0_i32_1 = arith.constant 0 : i32
    return %arg0, %c0_i32, %c0_i32_0 : i32, i32, i32
  }
  func.func @transform_12(%arg0: i32) -> (i32, i32) {
    %c0_i32 = arith.constant 0 : i32
    %c0_i32_0 = arith.constant 0 : i32
    %c0_i32_1 = arith.constant 0 : i32
    return %c0_i32, %c0_i32_0 : i32, i32
  }
}

</mosaic_0001>

<llo_original>
// kernel: llama_forward.1
$region0: #{llama_forward.1}
  #allocation0 [shape = 'u32[]', space=smem, size = 0x4, offset = 0x4, fixed_abs, tag = 'smem constant byte address 0x4 - core index']
  #allocation1 [shape = 'u32[144,128]{1,0:T(1,128)}', space=vmem, size = 0x12000, scoped, tag = 'internal scratch']
  #allocation2 [shape = 'bf16[16,128]{1,0:T(16,128)(2,1)}', space=vmem, size = 0x1000, scoped, tag = 'scratch operand']
  %s0 = inlined_call_operand.vmem [shape: bf16[16,128], index: 0, kind: input, shape index: {}]
  %s1 = inlined_call_operand.vmem [shape: f32[16,16], index: 1, kind: input, shape index: {}]
  %s2 = inlined_call_operand.vmem [shape: f32[16,128], index: 2, kind: input, shape index: {}]
  %s3 = inlined_call_operand.vmem [shape: f32[16,128], index: 3, kind: input, shape index: {}]
  %s4 = inlined_call_operand.vmem [shape: bf16[1,128], index: 4, kind: input, shape index: {}]
  %s5 = inlined_call_operand.vmem [shape: bf16[128,256], index: 5, kind: input, shape index: {}]
  %s6 = inlined_call_operand.vmem [shape: bf16[2,1,128], index: 6, kind: input, shape index: {}]
  %s7 = inlined_call_operand.hbm [shape: bf16[2,128,640], index: 7, kind: input, shape index: {}]
  %s8 = inlined_call_operand.hbm [shape: bf16[2,128,128], index: 8, kind: input, shape index: {}]
  %s9 = inlined_call_operand.vmem [shape: bf16[2,1,128], index: 9, kind: input, shape index: {}]
  %s10 = inlined_call_operand.hbm [shape: bf16[2,128,512], index: 10, kind: input, shape index: {}]
  %s11 = inlined_call_operand.vmem [shape: bf16[2,256,128], index: 11, kind: input, shape index: {}]
  %s12 = inlined_call_operand.hbm [shape: f32[16,256], index: 12, kind: output, shape index: {}]
  %s13 = sld [smem:[#allocation0]]
  $region101: #{llama_forward.1} parent=0
    _
  %s15 = ssub.s32 1, %s13
  %s16 = scalar_select 0, %s15, %s13
  $region1: #{llama_forward.1} parent=0
    #allocation3 [shape = 'u8[327680]{0}', space=vmem, size = 0x50000, scoped, tag = 'input window, operand 7']
    #allocation4 [shape = 's32[2]{0}', space=sflag, size = 0x8, scoped, tag = 'scoped memory for llama_forward.1']
    #allocation5 [shape = 's32[2]{0}', space=sflag, size = 0x8, scoped, tag = 'scoped memory for llama_forward.1']
    #allocation6 [shape = 'u8[65536]{0}', space=vmem, size = 0x10000, scoped, tag = 'input window, operand 8']
    #allocation7 [shape = 's32[2]{0}', space=sflag, size = 0x8, scoped, tag = 'scoped memory for llama_forward.1']
    #allocation8 [shape = 'u8[262144]{0}', space=vmem, size = 0x40000, scoped, tag = 'input window, operand 10']
    #allocation9 [shape = 'u8[16384]{0}', space=vmem, size = 0x4000, scoped, tag = 'output window, operand 0, single buffered']
    %17 = vsyncpa [#allocation4], 0
    %s18 = scalar_lea.sflag [#allocation4], 1
    %19 = vsyncpa %s18, 0
    %20 = vsyncpa [#allocation7], 0
    %s21 = scalar_lea.sflag [#allocation7], 1
    %22 = vsyncpa %s21, 0
    %23 = vsyncpa [#allocation5], 0
    loop: start=0, step=1, limit=4
    $region2: #{llama_forward.1} parent=1 // loop_pre_header
      _
    $region3: #{llama_forward.1} parent=1 // loop_header
      %s25 = sphi 0, %s29
      %p26 = scmp.ge.s32.totalorder %s25, 4
      %s33 = sphi 0, %s33
      %s35 = sphi 0, %s33
      %s36 = sphi 0, %s35
      %s50 = sphi 0, %s36
      %s54 = sphi 0, %s54
      %s56 = sphi 0, %s54
      %s57 = sphi 0, %s56
      %s71 = sphi 0, %s57
      %s75 = sphi 0, %s75
      %s77 = sphi 0, %s75
      %s78 = sphi 0, %s77
      %s92 = sphi 0, %s78
      %s96 = sphi 0, %s96
      %s98 = sphi 0, %s96
      %s99 = sphi 0, %s98
      %s113 = sphi 0, %s99
      %s117 = sphi 0, %s117
      %s119 = sphi 0, %s117
      %s120 = sphi 0, %s119
      %s134 = sphi 0, %s120
      %s138 = sphi 0, %s138
      %s140 = sphi 0, %s138
      %s141 = sphi 0, %s140
      %s155 = sphi 0, %s141
      %s161 = sphi 0, %s163
      %s164 = sphi 0, %s161
      %s165 = sphi 0, %s164
      %s181 = sphi 0, %s165
      %s187 = sphi 0, %s189
      %s190 = sphi 0, %s187
      %s191 = sphi 0, %s190
      %s207 = sphi 0, %s191
      %s213 = sphi 0, %s215
      %s216 = sphi 0, %s213
      %s217 = sphi 0, %s216
      %s233 = sphi 0, %s217
      %s239 = sphi 0, %s241
      %s242 = sphi 0, %s239
      %s243 = sphi 0, %s242
      %s259 = sphi 0, %s243
      %s265 = sphi 0, %s267
      %s268 = sphi 0, %s265
      %s269 = sphi 0, %s268
      %s285 = sphi 0, %s269
      %s291 = sphi 0, %s293
      %s294 = sphi 0, %s291
      %s295 = sphi 0, %s294
      %s311 = sphi 0, %s295
      %s315 = sphi 0, %s315
      %s317 = sphi 0, %s315
      %s318 = sphi 0, %s317
      %s332 = sphi 0, %s318
    $region4: #{llama_forward.1} parent=1 // loop_header_branch
      %28 = sbr.rel (%p26) target = $region8
    $region5: #{llama_forward.1} parent=1 // loop_body
      %s30 = ssub.s32 %s25, 1
      %s31 = ssub.s32 %s25, 2
      %s32 = sadd.s32 %s25, 1
      %s34 = sadd.s32 %s33, 1
      %p37 = scmp.eq.s32.totalorder %s25, 1
      %p38 = scmp.ne.s32.totalorder %s33, %s35
      %p39 = scmp.eq.s32.totalorder %s25, 0
      %p40 = por %p38, %p39
      %p41 = scmp.ne.s32.totalorder %s33, %s35
      %p42 = scmp.eq.s32.totalorder %s30, 1
      %p43 = por %p41, %p42
      %p44 = scmp.ne.s32.totalorder %s35, %s36
      %p45 = scmp.eq.s32.totalorder %s30, 0
      %p46 = por %p44, %p45
      %p47 = scmp.ne.s32.totalorder %s35, %s36
      %p48 = scmp.eq.s32.totalorder %s31, 1
      %p49 = por %p47, %p48
      %p51 = scmp.ne.s32.totalorder %s36, %s50
      %p52 = scmp.eq.s32.totalorder %s31, 0
      %p53 = por %p51, %p52
      %s55 = sadd.s32 %s54, 1
      %p58 = scmp.eq.s32.totalorder %s25, 1
      %p59 = scmp.ne.s32.totalorder %s54, %s56
      %p60 = scmp.eq.s32.totalorder %s25, 0
      %p61 = por %p59, %p60
      %p62 = scmp.ne.s32.totalorder %s54, %s56
      %p63 = scmp.eq.s32.totalorder %s30, 1
      %p64 = por %p62, %p63
      %p65 = scmp.ne.s32.totalorder %s56, %s57
      %p66 = scmp.eq.s32.totalorder %s30, 0
      %p67 = por %p65, %p66
      %p68 = scmp.ne.s32.totalorder %s56, %s57
      %p69 = scmp.eq.s32.totalorder %s31, 1
      %p70 = por %p68, %p69
      %p72 = scmp.ne.s32.totalorder %s57, %s71
      %p73 = scmp.eq.s32.totalorder %s31, 0
      %p74 = por %p72, %p73
      %s76 = sadd.s32 %s75, 1
      %p79 = scmp.eq.s32.totalorder %s25, 1
      %p80 = scmp.ne.s32.totalorder %s75, %s77
      %p81 = scmp.eq.s32.totalorder %s25, 0
      %p82 = por %p80, %p81
      %p83 = scmp.ne.s32.totalorder %s75, %s77
      %p84 = scmp.eq.s32.totalorder %s30, 1
      %p85 = por %p83, %p84
      %p86 = scmp.ne.s32.totalorder %s77, %s78
      %p87 = scmp.eq.s32.totalorder %s30, 0
      %p88 = por %p86, %p87
      %p89 = scmp.ne.s32.totalorder %s77, %s78
      %p90 = scmp.eq.s32.totalorder %s31, 1
      %p91 = por %p89, %p90
      %p93 = scmp.ne.s32.totalorder %s78, %s92
      %p94 = scmp.eq.s32.totalorder %s31, 0
      %p95 = por %p93, %p94
      %s97 = sadd.s32 %s96, 1
      %p100 = scmp.eq.s32.totalorder %s25, 1
      %p101 = scmp.ne.s32.totalorder %s96, %s98
      %p102 = scmp.eq.s32.totalorder %s25, 0
      %p103 = por %p101, %p102
      %p104 = scmp.ne.s32.totalorder %s96, %s98
      %p105 = scmp.eq.s32.totalorder %s30, 1
      %p106 = por %p104, %p105
      %p107 = scmp.ne.s32.totalorder %s98, %s99
      %p108 = scmp.eq.s32.totalorder %s30, 0
      %p109 = por %p107, %p108
      %p110 = scmp.ne.s32.totalorder %s98, %s99
      %p111 = scmp.eq.s32.totalorder %s31, 1
      %p112 = por %p110, %p111
      %p114 = scmp.ne.s32.totalorder %s99, %s113
      %p115 = scmp.eq.s32.totalorder %s31, 0
      %p116 = por %p114, %p115
      %s118 = sadd.s32 %s117, 1
      %p121 = scmp.eq.s32.totalorder %s25, 1
      %p122 = scmp.ne.s32.totalorder %s117, %s119
      %p123 = scmp.eq.s32.totalorder %s25, 0
      %p124 = por %p122, %p123
      %p125 = scmp.ne.s32.totalorder %s117, %s119
      %p126 = scmp.eq.s32.totalorder %s30, 1
      %p127 = por %p125, %p126
      %p128 = scmp.ne.s32.totalorder %s119, %s120
      %p129 = scmp.eq.s32.totalorder %s30, 0
      %p130 = por %p128, %p129
      %p131 = scmp.ne.s32.totalorder %s119, %s120
      %p132 = scmp.eq.s32.totalorder %s31, 1
      %p133 = por %p131, %p132
      %p135 = scmp.ne.s32.totalorder %s120, %s134
      %p136 = scmp.eq.s32.totalorder %s31, 0
      %p137 = por %p135, %p136
      %s139 = sadd.s32 %s138, 1
      %p142 = scmp.eq.s32.totalorder %s25, 1
      %p143 = scmp.ne.s32.totalorder %s138, %s140
      %p144 = scmp.eq.s32.totalorder %s25, 0
      %p145 = por %p143, %p144
      %p146 = scmp.ne.s32.totalorder %s138, %s140
      %p147 = scmp.eq.s32.totalorder %s30, 1
      %p148 = por %p146, %p147
      %p149 = scmp.ne.s32.totalorder %s140, %s141
      %p150 = scmp.eq.s32.totalorder %s30, 0
      %p151 = por %p149, %p150
      %p152 = scmp.ne.s32.totalorder %s140, %s141
      %p153 = scmp.eq.s32.totalorder %s31, 1
      %p154 = por %p152, %p153
      %p156 = scmp.ne.s32.totalorder %s141, %s155
      %p157 = scmp.eq.s32.totalorder %s31, 0
      %p158 = por %p156, %p157
      %s159 = ssub.s32 %s25, %s32
      %p160 = scmp.eq.s32.totalorder %s159, 0
      %s162 = sadd.s32 %s161, 1
      %s163 = scalar_select %p160, %s161, %s162
      %p166 = pneg %p160
      %p167 = scmp.eq.s32.totalorder %s25, 1
      %p168 = por %p166, %p167
      %p169 = scmp.ne.s32.totalorder %s161, %s164
      %p170 = scmp.eq.s32.totalorder %s25, 0
      %p171 = por %p169, %p170
      %p172 = scmp.ne.s32.totalorder %s161, %s164
      %p173 = scmp.eq.s32.totalorder %s30, 1
      %p174 = por %p172, %p173
      %p175 = scmp.ne.s32.totalorder %s164, %s165
      %p176 = scmp.eq.s32.totalorder %s30, 0
      %p177 = por %p175, %p176
      %p178 = scmp.ne.s32.totalorder %s164, %s165
      %p179 = scmp.eq.s32.totalorder %s31, 1
      %p180 = por %p178, %p179
      %p182 = scmp.ne.s32.totalorder %s165, %s181
      %p183 = scmp.eq.s32.totalorder %s31, 0
      %p184 = por %p182, %p183
      %s185 = ssub.s32 %s25, %s32
      %p186 = scmp.eq.s32.totalorder %s185, 0
      %s188 = sadd.s32 %s187, 1
      %s189 = scalar_select %p186, %s187, %s188
      %p192 = pneg %p186
      %p193 = scmp.eq.s32.totalorder %s25, 1
      %p194 = por %p192, %p193
      %p195 = scmp.ne.s32.totalorder %s187, %s190
      %p196 = scmp.eq.s32.totalorder %s25, 0
      %p197 = por %p195, %p196
      %p198 = scmp.ne.s32.totalorder %s187, %s190
      %p199 = scmp.eq.s32.totalorder %s30, 1
      %p200 = por %p198, %p199
      %p201 = scmp.ne.s32.totalorder %s190, %s191
      %p202 = scmp.eq.s32.totalorder %s30, 0
      %p203 = por %p201, %p202
      %p204 = scmp.ne.s32.totalorder %s190, %s191
      %p205 = scmp.eq.s32.totalorder %s31, 1
      %p206 = por %p204, %p205
      %p208 = scmp.ne.s32.totalorder %s191, %s207
      %p209 = scmp.eq.s32.totalorder %s31, 0
      %p210 = por %p208, %p209
      %s211 = ssub.s32 %s25, %s32
      %p212 = scmp.eq.s32.totalorder %s211, 0
      %s214 = sadd.s32 %s213, 1
      %s215 = scalar_select %p212, %s213, %s214
      %p218 = pneg %p212
      %p219 = scmp.eq.s32.totalorder %s25, 1
      %p220 = por %p218, %p219
      %p221 = scmp.ne.s32.totalorder %s213, %s216
      %p222 = scmp.eq.s32.totalorder %s25, 0
      %p223 = por %p221, %p222
      %p224 = scmp.ne.s32.totalorder %s213, %s216
      %p225 = scmp.eq.s32.totalorder %s30, 1
      %p226 = por %p224, %p225
      %p227 = scmp.ne.s32.totalorder %s216, %s217
      %p228 = scmp.eq.s32.totalorder %s30, 0
      %p229 = por %p227, %p228
      %p230 = scmp.ne.s32.totalorder %s216, %s217
      %p231 = scmp.eq.s32.totalorder %s31, 1
      %p232 = por %p230, %p231
      %p234 = scmp.ne.s32.totalorder %s217, %s233
      %p235 = scmp.eq.s32.totalorder %s31, 0
      %p236 = por %p234, %p235
      %s237 = ssub.s32 %s25, %s32
      %p238 = scmp.eq.s32.totalorder %s237, 0
      %s240 = sadd.s32 %s239, 1
      %s241 = scalar_select %p238, %s239, %s240
      %p244 = pneg %p238
      %p245 = scmp.eq.s32.totalorder %s25, 1
      %p246 = por %p244, %p245
      %p247 = scmp.ne.s32.totalorder %s239, %s242
      %p248 = scmp.eq.s32.totalorder %s25, 0
      %p249 = por %p247, %p248
      %p250 = scmp.ne.s32.totalorder %s239, %s242
      %p251 = scmp.eq.s32.totalorder %s30, 1
      %p252 = por %p250, %p251
      %p253 = scmp.ne.s32.totalorder %s242, %s243
      %p254 = scmp.eq.s32.totalorder %s30, 0
      %p255 = por %p253, %p254
      %p256 = scmp.ne.s32.totalorder %s242, %s243
      %p257 = scmp.eq.s32.totalorder %s31, 1
      %p258 = por %p256, %p257
      %p260 = scmp.ne.s32.totalorder %s243, %s259
      %p261 = scmp.eq.s32.totalorder %s31, 0
      %p262 = por %p260, %p261
      %s263 = ssub.s32 %s25, %s32
      %p264 = scmp.eq.s32.totalorder %s263, 0
      %s266 = sadd.s32 %s265, 1
      %s267 = scalar_select %p264, %s265, %s266
      %p270 = pneg %p264
      %p271 = scmp.eq.s32.totalorder %s25, 1
      %p272 = por %p270, %p271
      %p273 = scmp.ne.s32.totalorder %s265, %s268
      %p274 = scmp.eq.s32.totalorder %s25, 0
      %p275 = por %p273, %p274
      %p276 = scmp.ne.s32.totalorder %s265, %s268
      %p277 = scmp.eq.s32.totalorder %s30, 1
      %p278 = por %p276, %p277
      %p279 = scmp.ne.s32.totalorder %s268, %s269
      %p280 = scmp.eq.s32.totalorder %s30, 0
      %p281 = por %p279, %p280
      %p282 = scmp.ne.s32.totalorder %s268, %s269
      %p283 = scmp.eq.s32.totalorder %s31, 1
      %p284 = por %p282, %p283
      %p286 = scmp.ne.s32.totalorder %s269, %s285
      %p287 = scmp.eq.s32.totalorder %s31, 0
      %p288 = por %p286, %p287
      %s289 = ssub.s32 %s25, %s32
      %p290 = scmp.eq.s32.totalorder %s289, 0
      %s292 = sadd.s32 %s291, 1
      %s293 = scalar_select %p290, %s291, %s292
      %p296 = pneg %p290
      %p297 = scmp.eq.s32.totalorder %s25, 1
      %p298 = por %p296, %p297
      %p299 = scmp.ne.s32.totalorder %s291, %s294
      %p300 = scmp.eq.s32.totalorder %s25, 0
      %p301 = por %p299, %p300
      %p302 = scmp.ne.s32.totalorder %s291, %s294
      %p303 = scmp.eq.s32.totalorder %s30, 1
      %p304 = por %p302, %p303
      %p305 = scmp.ne.s32.totalorder %s294, %s295
      %p306 = scmp.eq.s32.totalorder %s30, 0
      %p307 = por %p305, %p306
      %p308 = scmp.ne.s32.totalorder %s294, %s295
      %p309 = scmp.eq.s32.totalorder %s31, 1
      %p310 = por %p308, %p309
      %p312 = scmp.ne.s32.totalorder %s295, %s311
      %p313 = scmp.eq.s32.totalorder %s31, 0
      %p314 = por %p312, %p313
      %s316 = sadd.s32 %s315, 1
      %p319 = scmp.eq.s32.totalorder %s25, 1
      %p320 = scmp.ne.s32.totalorder %s315, %s317
      %p321 = scmp.eq.s32.totalorder %s25, 0
      %p322 = por %p320, %p321
      %p323 = scmp.ne.s32.totalorder %s315, %s317
      %p324 = scmp.eq.s32.totalorder %s30, 1
      %p325 = por %p323, %p324
      %p326 = scmp.ne.s32.totalorder %s317, %s318
      %p327 = scmp.eq.s32.totalorder %s30, 0
      %p328 = por %p326, %p327
      %p329 = scmp.ne.s32.totalorder %s317, %s318
      %p330 = scmp.eq.s32.totalorder %s31, 1
      %p331 = por %p329, %p330
      %p333 = scmp.ne.s32.totalorder %s318, %s332
      %p334 = scmp.eq.s32.totalorder %s31, 0
      %p335 = por %p333, %p334
      %p336 = scmp.le.s32.totalorder 1, %s25
      %p337 = scmp.lt.s32.totalorder %s25, 3
      %p338 = pnand %p336, %p337
      %p339 = pneg %p338
      // Predicated region
      $region9: #{llama_forward.1} parent=5 // pred_check
        _
      $region10: #{llama_forward.1} parent=5 // pred_check_branch
        %341 = sbr.rel (%p338) target = $region12
      $region11: #{llama_forward.1} parent=5 // pred_region
        %s342 = ssub.s32 %s25, 1
        // Predicated region
        $region13: #{llama_forward.1} parent=11 // pred_check
          %p343 = pneg %p46
        $region14: #{llama_forward.1} parent=11 // pred_check_branch
          %345 = sbr.rel (%p343) target = $region16
        $region15: #{llama_forward.1} parent=11 // pred_region
          _
        $region16: #{llama_forward.1} parent=11 // pred_fallthru
          _
        // Predicated region
        $region17: #{llama_forward.1} parent=11 // pred_check
          %p346 = pneg %p67
        $region18: #{llama_forward.1} parent=11 // pred_check_branch
          %348 = sbr.rel (%p346) target = $region20
        $region19: #{llama_forward.1} parent=11 // pred_region
          _
        $region20: #{llama_forward.1} parent=11 // pred_fallthru
          _
        // Predicated region
        $region21: #{llama_forward.1} parent=11 // pred_check
          %p349 = pneg %p88
        $region22: #{llama_forward.1} parent=11 // pred_check_branch
          %351 = sbr.rel (%p349) target = $region24
        $region23: #{llama_forward.1} parent=11 // pred_region
          _
        $region24: #{llama_forward.1} parent=11 // pred_fallthru
          _
        // Predicated region
        $region25: #{llama_forward.1} parent=11 // pred_check
          %p352 = pneg %p109
        $region26: #{llama_forward.1} parent=11 // pred_check_branch
          %354 = sbr.rel (%p352) target = $region28
        $region27: #{llama_forward.1} parent=11 // pred_region
          _
        $region28: #{llama_forward.1} parent=11 // pred_fallthru
          _
        // Predicated region
        $region29: #{llama_forward.1} parent=11 // pred_check
          %p355 = pneg %p130
        $region30: #{llama_forward.1} parent=11 // pred_check_branch
          %357 = sbr.rel (%p355) target = $region32
        $region31: #{llama_forward.1} parent=11 // pred_region
          _
        $region32: #{llama_forward.1} parent=11 // pred_fallthru
          _
        // Predicated region
        $region33: #{llama_forward.1} parent=11 // pred_check
          %p358 = pneg %p151
        $region34: #{llama_forward.1} parent=11 // pred_check_branch
          %360 = sbr.rel (%p358) target = $region36
        $region35: #{llama_forward.1} parent=11 // pred_region
          _
        $region36: #{llama_forward.1} parent=11 // pred_fallthru
          _
      $region12: #{llama_forward.1} parent=5 // pred_fallthru
        _
      %p361 = scmp.lt.s32.totalorder %s25, 2
      // Predicated region
      $region37: #{llama_forward.1} parent=5 // pred_check
        %p362 = pneg %p361
      $region38: #{llama_forward.1} parent=5 // pred_check_branch
        %364 = sbr.rel (%p362) target = $region40
      $region39: #{llama_forward.1} parent=5 // pred_region
        // Predicated region
        $region41: #{llama_forward.1} parent=39 // pred_check
          %p365 = pneg %p171
        $region42: #{llama_forward.1} parent=39 // pred_check_branch
          %367 = sbr.rel (%p365) target = $region44
        $region43: #{llama_forward.1} parent=39 // pred_region
          %p368 = scmp.lt.s32.totalorder %s25, 1
          %s369 = scalar_select %p368, %s25, 1
          %s370 = scalar_lea.vmem %s6, %s369
        $region44: #{llama_forward.1} parent=39 // pred_fallthru
          _
        // Predicated region
        $region45: #{llama_forward.1} parent=39 // pred_check
          %p371 = pneg %p197
        $region46: #{llama_forward.1} parent=39 // pred_check_branch
          %373 = sbr.rel (%p371) target = $region48
        $region47: #{llama_forward.1} parent=39 // pred_region
          %s374 = sand.u32 %s187, 1
          %s375 = scalar_lea.sflag [#allocation4], %s374
          %s376 = sand.u32 %s187, 1
          %s377 = smul.addr %s376, 320
          %s378 = scalar_lea.vmem [#allocation3], %s377
          %s380 = ssub.s32 5120, 5120
          %381 = vsyncadd %s375, %s380
          %s382 = smul.addr %s25, 80
          %s383 = smul.addr %s382, 64
          %s384 = scalar_lea.hbm %s7, %s383
          %s385 = sshll.u32 %s378, 4
          %s386 = int_to_ptr.vmem [resolvable:$true] %s385
          %391 = dma.hbm_to_vmem [thread:$0]  %s384, 5120, %s386, %s375, 320, 320, 20
        $region48: #{llama_forward.1} parent=39 // pred_fallthru
          _
        // Predicated region
        $region49: #{llama_forward.1} parent=39 // pred_check
          %p392 = pneg %p223
        $region50: #{llama_forward.1} parent=39 // pred_check_branch
          %394 = sbr.rel (%p392) target = $region52
        $region51: #{llama_forward.1} parent=39 // pred_region
          %s395 = sand.u32 %s25, 1
          %s396 = scalar_lea.sflag [#allocation7], %s395
          %s397 = sand.u32 %s213, 1
          %s398 = smul.addr %s397, 64
          %s399 = scalar_lea.vmem [#allocation6], %s398
          %s401 = ssub.s32 1024, 1024
          %402 = vsyncadd %s396, %s401
          %s403 = smul.addr %s25, 16
          %s404 = smul.addr %s403, 64
          %s405 = scalar_lea.hbm %s8, %s404
          %s406 = sshll.u32 %s399, 4
          %s407 = int_to_ptr.vmem [resolvable:$true] %s406
          %412 = dma.hbm_to_vmem [thread:$0]  %s405, 1024, %s407, %s396, 64, 64, 4
        $region52: #{llama_forward.1} parent=39 // pred_fallthru
          _
        // Predicated region
        $region53: #{llama_forward.1} parent=39 // pred_check
          %p413 = pneg %p249
        $region54: #{llama_forward.1} parent=39 // pred_check_branch
          %415 = sbr.rel (%p413) target = $region56
        $region55: #{llama_forward.1} parent=39 // pred_region
          %p416 = scmp.lt.s32.totalorder %s25, 1
          %s417 = scalar_select %p416, %s25, 1
          %s418 = scalar_lea.vmem %s9, %s417
        $region56: #{llama_forward.1} parent=39 // pred_fallthru
          _
        // Predicated region
        $region57: #{llama_forward.1} parent=39 // pred_check
          %p419 = pneg %p275
        $region58: #{llama_forward.1} parent=39 // pred_check_branch
          %421 = sbr.rel (%p419) target = $region60
        $region59: #{llama_forward.1} parent=39 // pred_region
          %s422 = sand.u32 %s25, 1
          %s423 = scalar_lea.sflag [#allocation7], %s422
          %s424 = sand.u32 %s265, 1
          %s425 = smul.addr %s424, 256
          %s426 = scalar_lea.vmem [#allocation8], %s425
          %s428 = ssub.s32 4096, 4096
          %429 = vsyncadd %s423, %s428
          %s430 = smul.addr %s25, 64
          %s431 = smul.addr %s430, 64
          %s432 = scalar_lea.hbm %s10, %s431
          %s433 = sshll.u32 %s426, 4
          %s434 = int_to_ptr.vmem [resolvable:$true] %s433
          %439 = dma.hbm_to_vmem [thread:$0]  %s432, 4096, %s434, %s423, 256, 256, 16
        $region60: #{llama_forward.1} parent=39 // pred_fallthru
          _
        // Predicated region
        $region61: #{llama_forward.1} parent=39 // pred_check
          %p440 = pneg %p301
        $region62: #{llama_forward.1} parent=39 // pred_check_branch
          %442 = sbr.rel (%p440) target = $region64
        $region63: #{llama_forward.1} parent=39 // pred_region
          %p443 = scmp.lt.s32.totalorder %s25, 1
          %s444 = scalar_select %p443, %s25, 1
          %s445 = smul.addr %s444, 32
          %s446 = smul.addr %s445, 4
          %s447 = scalar_lea.vmem %s11, %s446
        $region64: #{llama_forward.1} parent=39 // pred_fallthru
          _
      $region40: #{llama_forward.1} parent=5 // pred_fallthru
        _
      %p448 = scmp.le.s32.totalorder 1, %s25
      %p449 = scmp.lt.s32.totalorder %s25, 3
      %p450 = pnand %p448, %p449
      %p451 = pneg %p450
      // Predicated region
      $region65: #{llama_forward.1} parent=5 // pred_check
        _
      $region66: #{llama_forward.1} parent=5 // pred_check_branch
        %453 = sbr.rel (%p450) target = $region68
      $region67: #{llama_forward.1} parent=5 // pred_region
        %s454 = ssub.s32 %s25, 1
        %s455 = sand.u32 %s190, 1
        %s456 = scalar_lea.sflag [#allocation4], %s455
        %s457 = sand.u32 %s190, 1
        %s458 = smul.addr %s457, 320
        %s459 = scalar_lea.vmem [#allocation3], %s458
        // Predicated region
        $region69: #{llama_forward.1} parent=67 // pred_check
          %p460 = pneg %p203
        $region70: #{llama_forward.1} parent=67 // pred_check_branch
          %462 = sbr.rel (%p460) target = $region72
        $region71: #{llama_forward.1} parent=67 // pred_region
          %463 = dma.done %s456, 5120
        $region72: #{llama_forward.1} parent=67 // pred_fallthru
          _
        %s464 = sand.u32 %s30, 1
        %s465 = scalar_lea.sflag [#allocation7], %s464
        %s466 = sand.u32 %s216, 1
        %s467 = smul.addr %s466, 64
        %s468 = scalar_lea.vmem [#allocation6], %s467
        // Predicated region
        $region73: #{llama_forward.1} parent=67 // pred_check
          %p469 = pneg %p229
        $region74: #{llama_forward.1} parent=67 // pred_check_branch
          %471 = sbr.rel (%p469) target = $region76
        $region75: #{llama_forward.1} parent=67 // pred_region
          %472 = dma.done %s465, 1024
        $region76: #{llama_forward.1} parent=67 // pred_fallthru
          _
        %s473 = sand.u32 %s30, 1
        %s474 = scalar_lea.sflag [#allocation7], %s473
        %s475 = sand.u32 %s268, 1
        %s476 = smul.addr %s475, 256
        %s477 = scalar_lea.vmem [#allocation8], %s476
        // Predicated region
        $region77: #{llama_forward.1} parent=67 // pred_check
          %p478 = pneg %p281
        $region78: #{llama_forward.1} parent=67 // pred_check_branch
          %480 = sbr.rel (%p478) target = $region80
        $region79: #{llama_forward.1} parent=67 // pred_region
          %481 = dma.done %s474, 4096
        $region80: #{llama_forward.1} parent=67 // pred_fallthru
          _
        %p482 = pneg %p46
        %p483 = pneg %p43
        %p484 = pneg %p67
        %p485 = pneg %p64
        %p486 = pneg %p88
        %p487 = pneg %p85
        %p488 = pneg %p109
        %p489 = pneg %p106
        %p490 = pneg %p130
        %p491 = pneg %p127
        %p492 = pneg %p151
        %p493 = pneg %p148
        %p494 = scmp.lt.s32.totalorder %s30, 1
        %s495 = scalar_select %p494, %s30, 1
        %s496 = scalar_lea.vmem %s6, %s495
        %p497 = pneg %p177
        %p498 = pneg %p174
        %s499 = sand.u32 %s190, 1
        %s500 = scalar_lea.sflag [#allocation4], %s499
        %s501 = sand.u32 %s190, 1
        %s502 = smul.addr %s501, 320
        %s503 = scalar_lea.vmem [#allocation3], %s502
        %p504 = pneg %p203
        %p505 = pneg %p200
        %s506 = sand.u32 %s30, 1
        %s507 = scalar_lea.sflag [#allocation7], %s506
        %s508 = sand.u32 %s216, 1
        %s509 = smul.addr %s508, 64
        %s510 = scalar_lea.vmem [#allocation6], %s509
        %p511 = pneg %p229
        %p512 = pneg %p226
        %p513 = scmp.lt.s32.totalorder %s30, 1
        %s514 = scalar_select %p513, %s30, 1
        %s515 = scalar_lea.vmem %s9, %s514
        %p516 = pneg %p255
        %p517 = pneg %p252
        %s518 = sand.u32 %s30, 1
        %s519 = scalar_lea.sflag [#allocation7], %s518
        %s520 = sand.u32 %s268, 1
        %s521 = smul.addr %s520, 256
        %s522 = scalar_lea.vmem [#allocation8], %s521
        %p523 = pneg %p281
        %p524 = pneg %p278
        %p525 = scmp.lt.s32.totalorder %s30, 1
        %s526 = scalar_select %p525, %s30, 1
        %s527 = smul.addr %s526, 32
        %s528 = smul.addr %s527, 4
        %s529 = scalar_lea.vmem %s11, %s528
        %p530 = pneg %p307
        %p531 = pneg %p304
        %p532 = pneg %p328
        %p533 = pneg %p325
        %p534 = scmp.lt.s32.totalorder %s30, 1
        %s535 = scalar_select %p534, %s30, 1
        %s536 = scalar_lea.vmem %s6, %s535
        %p537 = scmp.lt.s32.totalorder %s30, 1
        %s538 = scalar_select %p537, %s30, 1
        %s539 = scalar_lea.vmem %s9, %s538
        %p540 = scmp.lt.s32.totalorder %s30, 1
        %s541 = scalar_select %p540, %s30, 1
        %s542 = smul.addr %s541, 32
        %s543 = smul.addr %s542, 4
        %s544 = scalar_lea.vmem %s11, %s543
        %p546 = scmp.eq.s32.totalorder %s30, 0
        // Predicated region
        $region81: #{llama_forward.1} parent=67 // pred_check
          %p547 = pneg %p546
        $region82: #{llama_forward.1} parent=67 // pred_check_branch
          %549 = sbr.rel (%p547) target = $region84
        $region83: #{llama_forward.1} parent=67 // pred_region
          %v550 = vld [vmem:[%s0] sm:$0xf]
          %v551 = vld [vmem:[%s0 + $0x4] sm:$0xf]
          %v554 = vunpack.c.l.b16 %v550
          %v555 = vunpack.c.l.b16 %v551
          %v556 = vpack.c.b16 %v555, %v554
          %558 = vst [vmem:[#allocation2] sm:$0xff] %v556
        $region84: #{llama_forward.1} parent=67 // pred_fallthru
          _
        %v559 = vld [vmem:[#allocation2] sm:$0xff]
        %v560 = vld [vmem:[%s536] sm:$0x1]
        %v561 = vunpack.c.l.bf16 %v559
        %v562 = vunpack.c.h.bf16 %v559
        %v563 = vmul.f32 %v561, %v561
        %v564 = vmul.f32 %v562, %v562
        %565 = vadd.xlane.f32.xlu0 %v563
        %v566 = vpop.xlane.xlu0 %565
        %567 = vadd.xlane.f32.xlu0 %v564
        %v568 = vpop.xlane.xlu0 %567
        %v569 = vrcp.pop 128.0
        %v570 = vmul.f32 %v566, %v569
        %v571 = vmul.f32 %v568, %v569
        %v572 = vadd.f32 %v570, 1e-05
        %v573 = vadd.f32 %v571, 1e-05
        %v574 = vrsqrt.pop %v572
        %v575 = vrsqrt.pop %v573
        %v576 = vmul.f32 %v561, %v574
        %v577 = vmul.f32 %v562, %v575
        %v578 = vpack.c.bf16 %v577, %v576
        %v580 = vpack.i.b16 %v560, %v560
        %v582 = vlaneseq
        %v583 = vshrl.u32 %v582, 7
        %v584 = vsub.s32 0, %v583
        %v585 = vrot.slane %v580, %v584
        %v586 = vmul.bf16 %v578, %v585
        %v587 = vld [vmem:[%s459] sm:$0xff]
        %v588 = vld [vmem:[%s459 + $0x8] sm:$0xff]
        %v589 = vld [vmem:[%s459 + $0x10] sm:$0xf]
        %v590 = vld [vmem:[%s459 + $0x14] sm:$0xff]
        %v591 = vld [vmem:[%s459 + $0x1c] sm:$0xff]
        %v592 = vld [vmem:[%s459 + $0x24] sm:$0xf]
        %v593 = vld [vmem:[%s459 + $0x28] sm:$0xff]
        %v594 = vld [vmem:[%s459 + $0x30] sm:$0xff]
        %v595 = vld [vmem:[%s459 + $0x38] sm:$0xf]
        %v596 = vld [vmem:[%s459 + $0x3c] sm:$0xff]
        %v597 = vld [vmem:[%s459 + $0x44] sm:$0xff]
        %v598 = vld [vmem:[%s459 + $0x4c] sm:$0xf]
        %v599 = vld [vmem:[%s459 + $0x50] sm:$0xff]
        %v600 = vld [vmem:[%s459 + $0x58] sm:$0xff]
        %v601 = vld [vmem:[%s459 + $0x60] sm:$0xf]
        %v602 = vld [vmem:[%s459 + $0x64] sm:$0xff]
        %v603 = vld [vmem:[%s459 + $0x6c] sm:$0xff]
        %v604 = vld [vmem:[%s459 + $0x74] sm:$0xf]
        %v605 = vld [vmem:[%s459 + $0x78] sm:$0xff]
        %v606 = vld [vmem:[%s459 + $0x80] sm:$0xff]
        %v607 = vld [vmem:[%s459 + $0x88] sm:$0xf]
        %v608 = vld [vmem:[%s459 + $0x8c] sm:$0xff]
        %v609 = vld [vmem:[%s459 + $0x94] sm:$0xff]
        %v610 = vld [vmem:[%s459 + $0x9c] sm:$0xf]
        %v611 = vld [vmem:[%s459 + $0xa0] sm:$0xff]
        %v612 = vld [vmem:[%s459 + $0xa8] sm:$0xff]
        %v613 = vld [vmem:[%s459 + $0xb0] sm:$0xf]
        %v614 = vld [vmem:[%s459 + $0xb4] sm:$0xff]
        %v615 = vld [vmem:[%s459 + $0xbc] sm:$0xff]
        %v616 = vld [vmem:[%s459 + $0xc4] sm:$0xf]
        %v617 = vld [vmem:[%s459 + $0xc8] sm:$0xff]
        %v618 = vld [vmem:[%s459 + $0xd0] sm:$0xff]
        %v619 = vld [vmem:[%s459 + $0xd8] sm:$0xf]
        %v620 = vld [vmem:[%s459 + $0xdc] sm:$0xff]
        %v621 = vld [vmem:[%s459 + $0xe4] sm:$0xff]
        %v622 = vld [vmem:[%s459 + $0xec] sm:$0xf]
        %v623 = vld [vmem:[%s459 + $0xf0] sm:$0xff]
        %v624 = vld [vmem:[%s459 + $0xf8] sm:$0xff]
        %v625 = vld [vmem:[%s459 + $0x100] sm:$0xf]
        %v626 = vld [vmem:[%s459 + $0x104] sm:$0xff]
        %v627 = vld [vmem:[%s459 + $0x10c] sm:$0xff]
        %v628 = vld [vmem:[%s459 + $0x114] sm:$0xf]
        %v629 = vld [vmem:[%s459 + $0x118] sm:$0xff]
        %v630 = vld [vmem:[%s459 + $0x120] sm:$0xff]
        %v631 = vld [vmem:[%s459 + $0x128] sm:$0xf]
        %v632 = vld [vmem:[%s459 + $0x12c] sm:$0xff]
        %v633 = vld [vmem:[%s459 + $0x134] sm:$0xff]
        %v634 = vld [vmem:[%s459 + $0x13c] sm:$0xf]
        %v683 = vunpack.c.l.b16 %v587
        %v684 = vunpack.c.h.b16 %v587
        %v685 = vunpack.c.l.b16 %v588
        %v686 = vunpack.c.h.b16 %v588
        %v687 = vunpack.c.l.b16 %v589
        %v688 = vunpack.c.l.b16 %v590
        %v689 = vunpack.c.h.b16 %v590
        %v690 = vunpack.c.l.b16 %v591
        %v691 = vunpack.c.h.b16 %v591
        %v692 = vunpack.c.l.b16 %v592
        %v693 = vunpack.c.l.b16 %v593
        %v694 = vunpack.c.h.b16 %v593
        %v695 = vunpack.c.l.b16 %v594
        %v696 = vunpack.c.h.b16 %v594
        %v697 = vunpack.c.l.b16 %v595
        %v698 = vunpack.c.l.b16 %v596
        %v699 = vunpack.c.h.b16 %v596
        %v700 = vunpack.c.l.b16 %v597
        %v701 = vunpack.c.h.b16 %v597
        %v702 = vunpack.c.l.b16 %v598
        %v703 = vunpack.c.l.b16 %v599
        %v704 = vunpack.c.h.b16 %v599
        %v705 = vunpack.c.l.b16 %v600
        %v706 = vunpack.c.h.b16 %v600
        %v707 = vunpack.c.l.b16 %v601
        %v708 = vunpack.c.l.b16 %v602
        %v709 = vunpack.c.h.b16 %v602
        %v710 = vunpack.c.l.b16 %v603
        %v711 = vunpack.c.h.b16 %v603
        %v712 = vunpack.c.l.b16 %v604
        %v713 = vunpack.c.l.b16 %v605
        %v714 = vunpack.c.h.b16 %v605
        %v715 = vunpack.c.l.b16 %v606
        %v716 = vunpack.c.h.b16 %v606
        %v717 = vunpack.c.l.b16 %v607
        %v718 = vunpack.c.l.b16 %v608
        %v719 = vunpack.c.h.b16 %v608
        %v720 = vunpack.c.l.b16 %v609
        %v721 = vunpack.c.h.b16 %v609
        %v722 = vunpack.c.l.b16 %v610
        %v723 = vunpack.c.l.b16 %v611
        %v724 = vunpack.c.h.b16 %v611
        %v725 = vunpack.c.l.b16 %v612
        %v726 = vunpack.c.h.b16 %v612
        %v727 = vunpack.c.l.b16 %v613
        %v728 = vunpack.c.l.b16 %v614
        %v729 = vunpack.c.h.b16 %v614
        %v730 = vunpack.c.l.b16 %v615
        %v731 = vunpack.c.h.b16 %v615
        %v732 = vunpack.c.l.b16 %v616
        %v733 = vunpack.c.l.b16 %v617
        %v734 = vunpack.c.h.b16 %v617
        %v735 = vunpack.c.l.b16 %v618
        %v736 = vunpack.c.h.b16 %v618
        %v737 = vunpack.c.l.b16 %v619
        %v738 = vunpack.c.l.b16 %v620
        %v739 = vunpack.c.h.b16 %v620
        %v740 = vunpack.c.l.b16 %v621
        %v741 = vunpack.c.h.b16 %v621
        %v742 = vunpack.c.l.b16 %v622
        %v743 = vunpack.c.l.b16 %v623
        %v744 = vunpack.c.h.b16 %v623
        %v745 = vunpack.c.l.b16 %v624
        %v746 = vunpack.c.h.b16 %v624
        %v747 = vunpack.c.l.b16 %v625
        %v748 = vunpack.c.l.b16 %v626
        %v749 = vunpack.c.h.b16 %v626
        %v750 = vunpack.c.l.b16 %v627
        %v751 = vunpack.c.h.b16 %v627
        %v752 = vunpack.c.l.b16 %v628
        %v753 = vunpack.c.l.b16 %v629
        %v754 = vunpack.c.h.b16 %v629
        %v755 = vunpack.c.l.b16 %v630
        %v756 = vunpack.c.h.b16 %v630
        %v757 = vunpack.c.l.b16 %v631
        %v758 = vunpack.c.l.b16 %v632
        %v759 = vunpack.c.h.b16 %v632
        %v760 = vunpack.c.l.b16 %v633
        %v761 = vunpack.c.h.b16 %v633
        %v762 = vunpack.c.l.b16 %v634
        %v763 = vpack.c.b16 %v688, %v683
        %v764 = vpack.c.b16 %v689, %v684
        %v765 = vpack.c.b16 %v690, %v685
        %v766 = vpack.c.b16 %v691, %v686
        %v767 = vpack.c.b16 %v692, %v687
        %v768 = vpack.c.b16 %v698, %v693
        %v769 = vpack.c.b16 %v699, %v694
        %v770 = vpack.c.b16 %v700, %v695
        %v771 = vpack.c.b16 %v701, %v696
        %v772 = vpack.c.b16 %v702, %v697
        %v773 = vpack.c.b16 %v708, %v703
        %v774 = vpack.c.b16 %v709, %v704
        %v775 = vpack.c.b16 %v710, %v705
        %v776 = vpack.c.b16 %v711, %v706
        %v777 = vpack.c.b16 %v712, %v707
        %v778 = vpack.c.b16 %v718, %v713
        %v779 = vpack.c.b16 %v719, %v714
        %v780 = vpack.c.b16 %v720, %v715
        %v781 = vpack.c.b16 %v721, %v716
        %v782 = vpack.c.b16 %v722, %v717
        %v783 = vpack.c.b16 %v728, %v723
        %v784 = vpack.c.b16 %v729, %v724
        %v785 = vpack.c.b16 %v730, %v725
        %v786 = vpack.c.b16 %v731, %v726
        %v787 = vpack.c.b16 %v732, %v727
        %v788 = vpack.c.b16 %v738, %v733
        %v789 = vpack.c.b16 %v739, %v734
        %v790 = vpack.c.b16 %v740, %v735
        %v791 = vpack.c.b16 %v741, %v736
        %v792 = vpack.c.b16 %v742, %v737
        %v793 = vpack.c.b16 %v748, %v743
        %v794 = vpack.c.b16 %v749, %v744
        %v795 = vpack.c.b16 %v750, %v745
        %v796 = vpack.c.b16 %v751, %v746
        %v797 = vpack.c.b16 %v752, %v747
        %v798 = vpack.c.b16 %v758, %v753
        %v799 = vpack.c.b16 %v759, %v754
        %v800 = vpack.c.b16 %v760, %v755
        %v801 = vpack.c.b16 %v761, %v756
        %v802 = vpack.c.b16 %v762, %v757
        %843 = vmatprep.subr.bf16.mxu0 %v764
        %844 = vmatpush1.bf16.msra.mxu0 %v763
        %845 = vmatprep.subr.bf16.mxu0 %v769
        %846 = vmatpush1.bf16.msra.mxu0 %v768
        %847 = vmatprep.subr.bf16.mxu0 %v774
        %848 = vmatpush1.bf16.msra.mxu0 %v773
        %849 = vmatprep.subr.bf16.mxu0 %v779
        %850 = vmatpush1.bf16.msra.mxu0 %v778
        %851 = vmatprep.subr.bf16.mxu0 %v784
        %852 = vmatpush1.bf16.msra.mxu0 %v783
        %853 = vmatprep.subr.bf16.mxu0 %v789
        %854 = vmatpush1.bf16.msra.mxu0 %v788
        %855 = vmatprep.subr.bf16.mxu0 %v794
        %856 = vmatpush1.bf16.msra.mxu0 %v793
        %857 = vmatprep.subr.bf16.mxu0 %v799
        %858 = vmatpush1.bf16.msra.mxu0 %v798
        %859 = vmatprep.subr.bf16.mxu0 0
        %860 = vmatpush1.bf16.msra.mxu0 0
        %861 = vmatprep.subr.bf16.mxu0 0
        %862 = vmatpush1.bf16.msra.mxu0 0
        %863 = vmatprep.subr.bf16.mxu0 0
        %864 = vmatpush1.bf16.msra.mxu0 0
        %865 = vmatprep.subr.bf16.mxu0 0
        %866 = vmatpush1.bf16.msra.mxu0 0
        %867 = vmatprep.subr.bf16.mxu0 0
        %868 = vmatpush1.bf16.msra.mxu0 0
        %869 = vmatprep.subr.bf16.mxu0 0
        %870 = vmatpush1.bf16.msra.mxu0 0
        %871 = vmatprep.subr.bf16.mxu0 0
        %872 = vmatpush1.bf16.msra.mxu0 0
        %873 = vmatprep.subr.bf16.mxu0 0
        %874 = vmatpush1.bf16.msra.mxu0 0
        %875 = vmatprep.mubr.bf16.mxu0 0
        %876 = vmatmul.mubr.bf16.gmra.mrb[0].mxu0 %v586
        %v877 = vpop.f32.mrb[0].mxu0
        %v878 = vadd.f32 0.0, %v877
        %v879 = vpop.f32.mrb[0].mxu0
        %v880 = vadd.f32 0.0, %v879
        %v881 = vpop.f32.mrb[0].mxu0
        %v882 = vadd.f32 0.0, %v881
        %v883 = vpop.f32.mrb[0].mxu0
        %v884 = vadd.f32 0.0, %v883
        %885 = vdwg.mxu0
        %886 = vmatprep.subr.bf16.mxu0 %v766
        %887 = vmatpush1.bf16.msra.mxu0 %v765
        %888 = vmatprep.subr.bf16.mxu0 %v771
        %889 = vmatpush1.bf16.msra.mxu0 %v770
        %890 = vmatprep.subr.bf16.mxu0 %v776
        %891 = vmatpush1.bf16.msra.mxu0 %v775
        %892 = vmatprep.subr.bf16.mxu0 %v781
        %893 = vmatpush1.bf16.msra.mxu0 %v780
        %894 = vmatprep.subr.bf16.mxu0 %v786
        %895 = vmatpush1.bf16.msra.mxu0 %v785
        %896 = vmatprep.subr.bf16.mxu0 %v791
        %897 = vmatpush1.bf16.msra.mxu0 %v790
        %898 = vmatprep.subr.bf16.mxu0 %v796
        %899 = vmatpush1.bf16.msra.mxu0 %v795
        %900 = vmatprep.subr.bf16.mxu0 %v801
        %901 = vmatpush1.bf16.msra.mxu0 %v800
        %902 = vmatprep.subr.bf16.mxu0 0
        %903 = vmatpush1.bf16.msra.mxu0 0
        %904 = vmatprep.subr.bf16.mxu0 0
        %905 = vmatpush1.bf16.msra.mxu0 0
        %906 = vmatprep.subr.bf16.mxu0 0
        %907 = vmatpush1.bf16.msra.mxu0 0
        %908 = vmatprep.subr.bf16.mxu0 0
        %909 = vmatpush1.bf16.msra.mxu0 0
        %910 = vmatprep.subr.bf16.mxu0 0
        %911 = vmatpush1.bf16.msra.mxu0 0
        %912 = vmatprep.subr.bf16.mxu0 0
        %913 = vmatpush1.bf16.msra.mxu0 0
        %914 = vmatprep.subr.bf16.mxu0 0
        %915 = vmatpush1.bf16.msra.mxu0 0
        %916 = vmatprep.subr.bf16.mxu0 0
        %917 = vmatpush1.bf16.msra.mxu0 0
        %918 = vmatprep.mubr.bf16.mxu0 0
        %919 = vmatmul.mubr.bf16.gmra.mrb[0].mxu0 %v586
        %v920 = vpop.f32.mrb[0].mxu0
        %v921 = vadd.f32 0.0, %v920
        %v922 = vpop.f32.mrb[0].mxu0
        %v923 = vadd.f32 0.0, %v922
        %v924 = vpop.f32.mrb[0].mxu0
        %v925 = vadd.f32 0.0, %v924
        %v926 = vpop.f32.mrb[0].mxu0
        %v927 = vadd.f32 0.0, %v926
        %928 = vdwg.mxu0
        %929 = vmatprep.subr.bf16.mxu0 0
        %930 = vmatpush1.bf16.msra.mxu0 %v767
        %931 = vmatprep.subr.bf16.mxu0 0
        %932 = vmatpush1.bf16.msra.mxu0 %v772
        %933 = vmatprep.subr.bf16.mxu0 0
        %934 = vmatpush1.bf16.msra.mxu0 %v777
        %935 = vmatprep.subr.bf16.mxu0 0
        %936 = vmatpush1.bf16.msra.mxu0 %v782
        %937 = vmatprep.subr.bf16.mxu0 0
        %938 = vmatpush1.bf16.msra.mxu0 %v787
        %939 = vmatprep.subr.bf16.mxu0 0
        %940 = vmatpush1.bf16.msra.mxu0 %v792
        %941 = vmatprep.subr.bf16.mxu0 0
        %942 = vmatpush1.bf16.msra.mxu0 %v797
        %943 = vmatprep.subr.bf16.mxu0 0
        %944 = vmatpush1.bf16.msra.mxu0 %v802
        %945 = vmatprep.subr.bf16.mxu0 0
        %946 = vmatpush1.bf16.msra.mxu0 0
        %947 = vmatprep.subr.bf16.mxu0 0
        %948 = vmatpush1.bf16.msra.mxu0 0
        %949 = vmatprep.subr.bf16.mxu0 0
        %950 = vmatpush1.bf16.msra.mxu0 0
        %951 = vmatprep.subr.bf16.mxu0 0
        %952 = vmatpush1.bf16.msra.mxu0 0
        %953 = vmatprep.subr.bf16.mxu0 0
        %954 = vmatpush1.bf16.msra.mxu0 0
        %955 = vmatprep.subr.bf16.mxu0 0
        %956 = vmatpush1.bf16.msra.mxu0 0
        %957 = vmatprep.subr.bf16.mxu0 0
        %958 = vmatpush1.bf16.msra.mxu0 0
        %959 = vmatprep.subr.bf16.mxu0 0
        %960 = vmatpush1.bf16.msra.mxu0 0
        %961 = vmatprep.mubr.bf16.mxu0 0
        %962 = vmatmul.mubr.bf16.gmra.mrb[0].mxu0 %v586
        %v963 = vpop.f32.mrb[0].mxu0
        %v964 = vadd.f32 0.0, %v963
        %v965 = vpop.f32.mrb[0].mxu0
        %v966 = vpop.f32.mrb[0].mxu0
        %v967 = vadd.f32 0.0, %v966
        %v968 = vpop.f32.mrb[0].mxu0
        %969 = vdwg.mxu0
        %v970 = vld [vmem:[%s2] sm:$0xff]
        %v971 = vld [vmem:[%s2 + $0x8] sm:$0xff]
        %v972 = vld [vmem:[%s3] sm:$0xff]
        %v973 = vld [vmem:[%s3 + $0x8] sm:$0xff]
        %v974 = vmul.f32 %v878, %v970
        %v975 = vmul.f32 %v882, %v971
        %v976 = vmul.f32 %v923, %v972
        %v977 = vmul.f32 %v927, %v973
        %v978 = vadd.f32 %v974, %v976
        %v979 = vadd.f32 %v975, %v977
        %v980 = vpack.c.bf16 %v979, %v978
        %v981 = vmul.f32 %v880, %v970
        %v982 = vmul.f32 %v884, %v971
        %v983 = vmul.f32 %v964, %v972
        %v984 = vmul.f32 %v967, %v973
        %v985 = vadd.f32 %v981, %v983
        %v986 = vadd.f32 %v982, %v984
        %v987 = vpack.c.bf16 %v986, %v985
        %v988 = vpack.c.bf16 %v925, %v921
        %v989 = vld [vmem:[%s1] sm:$0xff]
        %v990 = vld [vmem:[%s1 + $0x8] sm:$0xff]
        %v991 = vld [vmem:[%s468] sm:$0xf]
        %v992 = vld [vmem:[%s468 + $0x4] sm:$0xf]
        %v993 = vld [vmem:[%s468 + $0x8] sm:$0xf]
        %v994 = vld [vmem:[%s468 + $0xc] sm:$0xf]
        %v995 = vld [vmem:[%s468 + $0x10] sm:$0xf]
        %v996 = vld [vmem:[%s468 + $0x14] sm:$0xf]
        %v997 = vld [vmem:[%s468 + $0x18] sm:$0xf]
        %v998 = vld [vmem:[%s468 + $0x1c] sm:$0xf]
        %v999 = vld [vmem:[%s468 + $0x20] sm:$0xf]
        %v1000 = vld [vmem:[%s468 + $0x24] sm:$0xf]
        %v1001 = vld [vmem:[%s468 + $0x28] sm:$0xf]
        %v1002 = vld [vmem:[%s468 + $0x2c] sm:$0xf]
        %v1003 = vld [vmem:[%s468 + $0x30] sm:$0xf]
        %v1004 = vld [vmem:[%s468 + $0x34] sm:$0xf]
        %v1005 = vld [vmem:[%s468 + $0x38] sm:$0xf]
        %v1006 = vld [vmem:[%s468 + $0x3c] sm:$0xf]
        %vm1007 = vcmask 261120
        %v1009 = vsel %vm1007, %v980, 0
        %v1012 = vsel %vm1007, %v987, 0
        %1014 = vmatprep.subr.bf16.mxu0 0
        %1015 = vmatpush1.bf16.xpose.msra.mxu0 %v1012
        %1016 = vmatprep.subr.bf16.mxu0 0
        %1017 = vmatpush1.bf16.xpose.msra.mxu0 0
        %1018 = vmatprep.subr.bf16.mxu0 0
        %1019 = vmatpush1.bf16.xpose.msra.mxu0 0
        %1020 = vmatprep.subr.bf16.mxu0 0
        %1021 = vmatpush1.bf16.xpose.msra.mxu0 0
        %1022 = vmatprep.subr.bf16.mxu0 0
        %1023 = vmatpush1.bf16.xpose.msra.mxu0 0
        %1024 = vmatprep.subr.bf16.mxu0 0
        %1025 = vmatpush1.bf16.xpose.msra.mxu0 0
        %1026 = vmatprep.subr.bf16.mxu0 0
        %1027 = vmatpush1.bf16.xpose.msra.mxu0 0
        %1028 = vmatprep.subr.bf16.mxu0 0
        %1029 = vmatpush1.bf16.xpose.msra.mxu0 0
        %1030 = vmatprep.subr.bf16.mxu0 0
        %1031 = vmatpush1.bf16.xpose.msra.mxu0 0
        %1032 = vmatprep.subr.bf16.mxu0 0
        %1033 = vmatpush1.bf16.xpose.msra.mxu0 0
        %1034 = vmatprep.subr.bf16.mxu0 0
        %1035 = vmatpush1.bf16.xpose.msra.mxu0 0
        %1036 = vmatprep.subr.bf16.mxu0 0
        %1037 = vmatpush1.bf16.xpose.msra.mxu0 0
        %1038 = vmatprep.subr.bf16.mxu0 0
        %1039 = vmatpush1.bf16.xpose.msra.mxu0 0
        %1040 = vmatprep.subr.bf16.mxu0 0
        %1041 = vmatpush1.bf16.xpose.msra.mxu0 0
        %1042 = vmatprep.subr.bf16.mxu0 0
        %1043 = vmatpush1.bf16.xpose.msra.mxu0 0
        %1044 = vmatprep.subr.bf16.mxu0 0
        %1045 = vmatpush1.bf16.xpose.msra.mxu0 0
        %1046 = vmatprep.mubr.bf16.mxu0 0
        %1047 = vmatmul.mubr.bf16.gmra.mrb[0].mxu0 %v1009
        %v1048 = vpop.f32.mrb[0].mxu0
        %v1049 = vadd.f32 0.0, %v1048
        %v1050 = vpop.f32.mrb[0].mxu0
        %v1051 = vpop.f32.mrb[0].mxu0
        %v1052 = vadd.f32 0.0, %v1051
        %v1053 = vpop.f32.mrb[0].mxu0
        %1054 = vdwg.mxu0
        %v1055 = vmul.f32 %v1049, 0.17677669
        %v1056 = vmul.f32 %v1052, 0.17677669
        %v1057 = vadd.f32 %v1055, %v989
        %v1058 = vadd.f32 %v1056, %v990
        %vm1059 = vcmask 130048
        %v1060 = vsel %vm1059, %v1057, -inf
        %1061 = vmax.xlane.f32.xlu0 %v1060
        %v1062 = vpop.xlane.xlu0 %1061
        %v1063 = vsel %vm1059, %v1058, -inf
        %1064 = vmax.xlane.f32.xlu0 %v1063
        %v1065 = vpop.xlane.xlu0 %1064
        %v1066 = vsub.f32 %v1057, %v1062
        %v1067 = vsub.f32 %v1058, %v1065
        %v1068 = vmul.f32 %v1066, 1.442695
        %v1069 = vpow.pop %v1068
        %v1070 = vmul.f32 %v1067, 1.442695
        %v1071 = vpow.pop %v1070
        %v1072 = vsel %vm1059, %v1069, 0.0
        %1073 = vadd.xlane.f32.xlu0 %v1072
        %v1074 = vpop.xlane.xlu0 %1073
        %v1075 = vsel %vm1059, %v1071, 0.0
        %1076 = vadd.xlane.f32.xlu0 %v1075
        %v1077 = vpop.xlane.xlu0 %1076
        %v1078 = vrcp.pop %v1074
        %v1079 = vrcp.pop %v1077
        %v1080 = vmul.f32 %v1069, %v1078
        %v1081 = vmul.f32 %v1071, %v1079
        %v1082 = vpack.c.bf16 %v1081, %v1080
        %v1084 = vsel %vm1059, %v1082, 0
        %1086 = vmatprep.subr.bf16.mxu0 0
        %1087 = vmatpush1.bf16.msra.mxu0 %v988
        %1088 = vmatprep.subr.bf16.mxu0 0
        %1089 = vmatpush1.bf16.msra.mxu0 0
        %1090 = vmatprep.subr.bf16.mxu0 0
        %1091 = vmatpush1.bf16.msra.mxu0 0
        %1092 = vmatprep.subr.bf16.mxu0 0
        %1093 = vmatpush1.bf16.msra.mxu0 0
        %1094 = vmatprep.subr.bf16.mxu0 0
        %1095 = vmatpush1.bf16.msra.mxu0 0
        %1096 = vmatprep.subr.bf16.mxu0 0
        %1097 = vmatpush1.bf16.msra.mxu0 0
        %1098 = vmatprep.subr.bf16.mxu0 0
        %1099 = vmatpush1.bf16.msra.mxu0 0
        %1100 = vmatprep.subr.bf16.mxu0 0
        %1101 = vmatpush1.bf16.msra.mxu0 0
        %1102 = vmatprep.subr.bf16.mxu0 0
        %1103 = vmatpush1.bf16.msra.mxu0 0
        %1104 = vmatprep.subr.bf16.mxu0 0
        %1105 = vmatpush1.bf16.msra.mxu0 0
        %1106 = vmatprep.subr.bf16.mxu0 0
        %1107 = vmatpush1.bf16.msra.mxu0 0
        %1108 = vmatprep.subr.bf16.mxu0 0
        %1109 = vmatpush1.bf16.msra.mxu0 0
        %1110 = vmatprep.subr.bf16.mxu0 0
        %1111 = vmatpush1.bf16.msra.mxu0 0
        %1112 = vmatprep.subr.bf16.mxu0 0
        %1113 = vmatpush1.bf16.msra.mxu0 0
        %1114 = vmatprep.subr.bf16.mxu0 0
        %1115 = vmatpush1.bf16.msra.mxu0 0
        %1116 = vmatprep.subr.bf16.mxu0 0
        %1117 = vmatpush1.bf16.msra.mxu0 0
        %1118 = vmatprep.mubr.bf16.mxu0 0
        %1119 = vmatmul.mubr.bf16.gmra.mrb[0].mxu0 %v1084
        %v1120 = vpop.f32.mrb[0].mxu0
        %v1121 = vadd.f32 0.0, %v1120
        %v1122 = vpop.f32.mrb[0].mxu0
        %v1123 = vpop.f32.mrb[0].mxu0
        %v1124 = vadd.f32 0.0, %v1123
        %v1125 = vpop.f32.mrb[0].mxu0
        %1126 = vdwg.mxu0
        %v1127 = vpack.c.bf16 %v1124, %v1121
        %1129 = vrot.lane.b32.xlu0 %v980, 96
        %v1130 = vpop.permute.xlu0 %1129
        %1132 = vrot.lane.b32.xlu0 %v987, 96
        %v1133 = vpop.permute.xlu0 %1132
        %v1135 = vsel %vm1007, %v1130, 0
        %v1138 = vsel %vm1007, %v1133, 0
        %1140 = vmatprep.subr.bf16.mxu0 0
        %1141 = vmatpush1.bf16.xpose.msra.mxu0 %v1138
        %1142 = vmatprep.subr.bf16.mxu0 0
        %1143 = vmatpush1.bf16.xpose.msra.mxu0 0
        %1144 = vmatprep.subr.bf16.mxu0 0
        %1145 = vmatpush1.bf16.xpose.msra.mxu0 0
        %1146 = vmatprep.subr.bf16.mxu0 0
        %1147 = vmatpush1.bf16.xpose.msra.mxu0 0
        %1148 = vmatprep.subr.bf16.mxu0 0
        %1149 = vmatpush1.bf16.xpose.msra.mxu0 0
        %1150 = vmatprep.subr.bf16.mxu0 0
        %1151 = vmatpush1.bf16.xpose.msra.mxu0 0
        %1152 = vmatprep.subr.bf16.mxu0 0
        %1153 = vmatpush1.bf16.xpose.msra.mxu0 0
        %1154 = vmatprep.subr.bf16.mxu0 0
        %1155 = vmatpush1.bf16.xpose.msra.mxu0 0
        %1156 = vmatprep.subr.bf16.mxu0 0
        %1157 = vmatpush1.bf16.xpose.msra.mxu0 0
        %1158 = vmatprep.subr.bf16.mxu0 0
        %1159 = vmatpush1.bf16.xpose.msra.mxu0 0
        %1160 = vmatprep.subr.bf16.mxu0 0
        %1161 = vmatpush1.bf16.xpose.msra.mxu0 0
        %1162 = vmatprep.subr.bf16.mxu0 0
        %1163 = vmatpush1.bf16.xpose.msra.mxu0 0
        %1164 = vmatprep.subr.bf16.mxu0 0
        %1165 = vmatpush1.bf16.xpose.msra.mxu0 0
        %1166 = vmatprep.subr.bf16.mxu0 0
        %1167 = vmatpush1.bf16.xpose.msra.mxu0 0
        %1168 = vmatprep.subr.bf16.mxu0 0
        %1169 = vmatpush1.bf16.xpose.msra.mxu0 0
        %1170 = vmatprep.subr.bf16.mxu0 0
        %1171 = vmatpush1.bf16.xpose.msra.mxu0 0
        %1172 = vmatprep.mubr.bf16.mxu0 0
        %1173 = vmatmul.mubr.bf16.gmra.mrb[0].mxu0 %v1135
        %v1174 = vpop.f32.mrb[0].mxu0
        %v1175 = vadd.f32 0.0, %v1174
        %v1176 = vpop.f32.mrb[0].mxu0
        %v1177 = vpop.f32.mrb[0].mxu0
        %v1178 = vadd.f32 0.0, %v1177
        %v1179 = vpop.f32.mrb[0].mxu0
        %1180 = vdwg.mxu0
        %v1181 = vmul.f32 %v1175, 0.17677669
        %v1182 = vmul.f32 %v1178, 0.17677669
        %v1183 = vadd.f32 %v1181, %v989
        %v1184 = vadd.f32 %v1182, %v990
        %v1185 = vsel %vm1059, %v1183, -inf
        %1186 = vmax.xlane.f32.xlu0 %v1185
        %v1187 = vpop.xlane.xlu0 %1186
        %v1188 = vsel %vm1059, %v1184, -inf
        %1189 = vmax.xlane.f32.xlu0 %v1188
        %v1190 = vpop.xlane.xlu0 %1189
        %v1191 = vsub.f32 %v1183, %v1187
        %v1192 = vsub.f32 %v1184, %v1190
        %v1193 = vmul.f32 %v1191, 1.442695
        %v1194 = vpow.pop %v1193
        %v1195 = vmul.f32 %v1192, 1.442695
        %v1196 = vpow.pop %v1195
        %v1197 = vsel %vm1059, %v1194, 0.0
        %1198 = vadd.xlane.f32.xlu0 %v1197
        %v1199 = vpop.xlane.xlu0 %1198
        %v1200 = vsel %vm1059, %v1196, 0.0
        %1201 = vadd.xlane.f32.xlu0 %v1200
        %v1202 = vpop.xlane.xlu0 %1201
        %v1203 = vrcp.pop %v1199
        %v1204 = vrcp.pop %v1202
        %v1205 = vmul.f32 %v1194, %v1203
        %v1206 = vmul.f32 %v1196, %v1204
        %v1207 = vpack.c.bf16 %v1206, %v1205
        %1209 = vrot.lane.b32.xlu0 %v988, 96
        %v1210 = vpop.permute.xlu0 %1209
        %v1213 = vsel %vm1059, %v1207, 0
        %1215 = vmatprep.subr.bf16.mxu0 0
        %1216 = vmatpush1.bf16.msra.mxu0 %v1210
        %1217 = vmatprep.subr.bf16.mxu0 0
        %1218 = vmatpush1.bf16.msra.mxu0 0
        %1219 = vmatprep.subr.bf16.mxu0 0
        %1220 = vmatpush1.bf16.msra.mxu0 0
        %1221 = vmatprep.subr.bf16.mxu0 0
        %1222 = vmatpush1.bf16.msra.mxu0 0
        %1223 = vmatprep.subr.bf16.mxu0 0
        %1224 = vmatpush1.bf16.msra.mxu0 0
        %1225 = vmatprep.subr.bf16.mxu0 0
        %1226 = vmatpush1.bf16.msra.mxu0 0
        %1227 = vmatprep.subr.bf16.mxu0 0
        %1228 = vmatpush1.bf16.msra.mxu0 0
        %1229 = vmatprep.subr.bf16.mxu0 0
        %1230 = vmatpush1.bf16.msra.mxu0 0
        %1231 = vmatprep.subr.bf16.mxu0 0
        %1232 = vmatpush1.bf16.msra.mxu0 0
        %1233 = vmatprep.subr.bf16.mxu0 0
        %1234 = vmatpush1.bf16.msra.mxu0 0
        %1235 = vmatprep.subr.bf16.mxu0 0
        %1236 = vmatpush1.bf16.msra.mxu0 0
        %1237 = vmatprep.subr.bf16.mxu0 0
        %1238 = vmatpush1.bf16.msra.mxu0 0
        %1239 = vmatprep.subr.bf16.mxu0 0
        %1240 = vmatpush1.bf16.msra.mxu0 0
        %1241 = vmatprep.subr.bf16.mxu0 0
        %1242 = vmatpush1.bf16.msra.mxu0 0
        %1243 = vmatprep.subr.bf16.mxu0 0
        %1244 = vmatpush1.bf16.msra.mxu0 0
        %1245 = vmatprep.subr.bf16.mxu0 0
        %1246 = vmatpush1.bf16.msra.mxu0 0
        %1247 = vmatprep.mubr.bf16.mxu0 0
        %1248 = vmatmul.mubr.bf16.gmra.mrb[0].mxu0 %v1213
        %v1249 = vpop.f32.mrb[0].mxu0
        %v1250 = vadd.f32 0.0, %v1249
        %v1251 = vpop.f32.mrb[0].mxu0
        %v1252 = vpop.f32.mrb[0].mxu0
        %v1253 = vadd.f32 0.0, %v1252
        %v1254 = vpop.f32.mrb[0].mxu0
        %1255 = vdwg.mxu0
        %v1256 = vpack.c.bf16 %v1253, %v1250
        %v1261 = vunpack.c.l.b16 %v995
        %v1262 = vunpack.c.l.b16 %v996
        %v1263 = vunpack.c.l.b16 %v997
        %v1264 = vunpack.c.l.b16 %v998
        %v1265 = vpack.c.b16 %v1262, %v1261
        %v1266 = vpack.c.b16 %v1264, %v1263
        %v1270 = vsel %vm1007, %v1256, 0
        %1272 = vmatprep.subr.bf16.mxu0 0
        %1273 = vmatpush1.bf16.msra.mxu0 %v1265
        %1274 = vmatprep.subr.bf16.mxu0 0
        %1275 = vmatpush1.bf16.msra.mxu0 %v1266
        %1276 = vmatprep.subr.bf16.mxu0 0
        %1277 = vmatpush1.bf16.msra.mxu0 0
        %1278 = vmatprep.subr.bf16.mxu0 0
        %1279 = vmatpush1.bf16.msra.mxu0 0
        %1280 = vmatprep.subr.bf16.mxu0 0
        %1281 = vmatpush1.bf16.msra.mxu0 0
        %1282 = vmatprep.subr.bf16.mxu0 0
        %1283 = vmatpush1.bf16.msra.mxu0 0
        %1284 = vmatprep.subr.bf16.mxu0 0
        %1285 = vmatpush1.bf16.msra.mxu0 0
        %1286 = vmatprep.subr.bf16.mxu0 0
        %1287 = vmatpush1.bf16.msra.mxu0 0
        %1288 = vmatprep.subr.bf16.mxu0 0
        %1289 = vmatpush1.bf16.msra.mxu0 0
        %1290 = vmatprep.subr.bf16.mxu0 0
        %1291 = vmatpush1.bf16.msra.mxu0 0
        %1292 = vmatprep.subr.bf16.mxu0 0
        %1293 = vmatpush1.bf16.msra.mxu0 0
        %1294 = vmatprep.subr.bf16.mxu0 0
        %1295 = vmatpush1.bf16.msra.mxu0 0
        %1296 = vmatprep.subr.bf16.mxu0 0
        %1297 = vmatpush1.bf16.msra.mxu0 0
        %1298 = vmatprep.subr.bf16.mxu0 0
        %1299 = vmatpush1.bf16.msra.mxu0 0
        %1300 = vmatprep.subr.bf16.mxu0 0
        %1301 = vmatpush1.bf16.msra.mxu0 0
        %1302 = vmatprep.subr.bf16.mxu0 0
        %1303 = vmatpush1.bf16.msra.mxu0 0
        %1304 = vmatprep.mubr.bf16.mxu0 0
        %1305 = vmatmul.mubr.bf16.gmra.mrb[0].mxu0 %v1270
        %v1306 = vpop.f32.mrb[0].mxu0
        %v1307 = vadd.f32 0.0, %v1306
        %v1308 = vpop.f32.mrb[0].mxu0
        %v1309 = vpop.f32.mrb[0].mxu0
        %v1310 = vadd.f32 0.0, %v1309
        %v1311 = vpop.f32.mrb[0].mxu0
        %1312 = vdwg.mxu0
        %v1317 = vunpack.c.l.b16 %v991
        %v1318 = vunpack.c.l.b16 %v992
        %v1319 = vunpack.c.l.b16 %v993
        %v1320 = vunpack.c.l.b16 %v994
        %v1321 = vpack.c.b16 %v1318, %v1317
        %v1322 = vpack.c.b16 %v1320, %v1319
        %v1326 = vsel %vm1007, %v1127, 0
        %1328 = vmatprep.subr.bf16.mxu0 0
        %1329 = vmatpush1.bf16.msra.mxu0 %v1321
        %1330 = vmatprep.subr.bf16.mxu0 0
        %1331 = vmatpush1.bf16.msra.mxu0 %v1322
        %1332 = vmatprep.subr.bf16.mxu0 0
        %1333 = vmatpush1.bf16.msra.mxu0 0
        %1334 = vmatprep.subr.bf16.mxu0 0
        %1335 = vmatpush1.bf16.msra.mxu0 0
        %1336 = vmatprep.subr.bf16.mxu0 0
        %1337 = vmatpush1.bf16.msra.mxu0 0
        %1338 = vmatprep.subr.bf16.mxu0 0
        %1339 = vmatpush1.bf16.msra.mxu0 0
        %1340 = vmatprep.subr.bf16.mxu0 0
        %1341 = vmatpush1.bf16.msra.mxu0 0
        %1342 = vmatprep.subr.bf16.mxu0 0
        %1343 = vmatpush1.bf16.msra.mxu0 0
        %1344 = vmatprep.subr.bf16.mxu0 0
        %1345 = vmatpush1.bf16.msra.mxu0 0
        %1346 = vmatprep.subr.bf16.mxu0 0
        %1347 = vmatpush1.bf16.msra.mxu0 0
        %1348 = vmatprep.subr.bf16.mxu0 0
        %1349 = vmatpush1.bf16.msra.mxu0 0
        %1350 = vmatprep.subr.bf16.mxu0 0
        %1351 = vmatpush1.bf16.msra.mxu0 0
        %1352 = vmatprep.subr.bf16.mxu0 0
        %1353 = vmatpush1.bf16.msra.mxu0 0
        %1354 = vmatprep.subr.bf16.mxu0 0
        %1355 = vmatpush1.bf16.msra.mxu0 0
        %1356 = vmatprep.subr.bf16.mxu0 0
        %1357 = vmatpush1.bf16.msra.mxu0 0
        %1358 = vmatprep.subr.bf16.mxu0 0
        %1359 = vmatpush1.bf16.msra.mxu0 0
        %1360 = vmatprep.mubr.bf16.mxu0 0
        %1361 = vmatmul.mubr.bf16.gmra.mrb[0].mxu0 %v1326
        %v1362 = vpop.f32.mrb[0].mxu0
        %v1363 = vadd.f32 %v1307, %v1362
        %v1364 = vpop.f32.mrb[0].mxu0
        %v1365 = vpop.f32.mrb[0].mxu0
        %v1366 = vadd.f32 %v1310, %v1365
        %v1367 = vpop.f32.mrb[0].mxu0
        %1368 = vdwg.mxu0
        %1369 = vrot.lane.b32.xlu0 %v980, 64
        %v1370 = vpop.permute.xlu0 %1369
        %1371 = vrot.lane.b32.xlu0 %v987, 64
        %v1372 = vpop.permute.xlu0 %1371
        %v1374 = vsel %vm1007, %v1370, 0
        %v1377 = vsel %vm1007, %v1372, 0
        %1379 = vmatprep.subr.bf16.mxu0 0
        %1380 = vmatpush1.bf16.xpose.msra.mxu0 %v1377
        %1381 = vmatprep.subr.bf16.mxu0 0
        %1382 = vmatpush1.bf16.xpose.msra.mxu0 0
        %1383 = vmatprep.subr.bf16.mxu0 0
        %1384 = vmatpush1.bf16.xpose.msra.mxu0 0
        %1385 = vmatprep.subr.bf16.mxu0 0
        %1386 = vmatpush1.bf16.xpose.msra.mxu0 0
        %1387 = vmatprep.subr.bf16.mxu0 0
        %1388 = vmatpush1.bf16.xpose.msra.mxu0 0
        %1389 = vmatprep.subr.bf16.mxu0 0
        %1390 = vmatpush1.bf16.xpose.msra.mxu0 0
        %1391 = vmatprep.subr.bf16.mxu0 0
        %1392 = vmatpush1.bf16.xpose.msra.mxu0 0
        %1393 = vmatprep.subr.bf16.mxu0 0
        %1394 = vmatpush1.bf16.xpose.msra.mxu0 0
        %1395 = vmatprep.subr.bf16.mxu0 0
        %1396 = vmatpush1.bf16.xpose.msra.mxu0 0
        %1397 = vmatprep.subr.bf16.mxu0 0
        %1398 = vmatpush1.bf16.xpose.msra.mxu0 0
        %1399 = vmatprep.subr.bf16.mxu0 0
        %1400 = vmatpush1.bf16.xpose.msra.mxu0 0
        %1401 = vmatprep.subr.bf16.mxu0 0
        %1402 = vmatpush1.bf16.xpose.msra.mxu0 0
        %1403 = vmatprep.subr.bf16.mxu0 0
        %1404 = vmatpush1.bf16.xpose.msra.mxu0 0
        %1405 = vmatprep.subr.bf16.mxu0 0
        %1406 = vmatpush1.bf16.xpose.msra.mxu0 0
        %1407 = vmatprep.subr.bf16.mxu0 0
        %1408 = vmatpush1.bf16.xpose.msra.mxu0 0
        %1409 = vmatprep.subr.bf16.mxu0 0
        %1410 = vmatpush1.bf16.xpose.msra.mxu0 0
        %1411 = vmatprep.mubr.bf16.mxu0 0
        %1412 = vmatmul.mubr.bf16.gmra.mrb[0].mxu0 %v1374
        %v1413 = vpop.f32.mrb[0].mxu0
        %v1414 = vadd.f32 0.0, %v1413
        %v1415 = vpop.f32.mrb[0].mxu0
        %v1416 = vpop.f32.mrb[0].mxu0
        %v1417 = vadd.f32 0.0, %v1416
        %v1418 = vpop.f32.mrb[0].mxu0
        %1419 = vdwg.mxu0
        %v1420 = vmul.f32 %v1414, 0.17677669
        %v1421 = vmul.f32 %v1417, 0.17677669
        %v1422 = vadd.f32 %v1420, %v989
        %v1423 = vadd.f32 %v1421, %v990
        %v1424 = vsel %vm1059, %v1422, -inf
        %1425 = vmax.xlane.f32.xlu0 %v1424
        %v1426 = vpop.xlane.xlu0 %1425
        %v1427 = vsel %vm1059, %v1423, -inf
        %1428 = vmax.xlane.f32.xlu0 %v1427
        %v1429 = vpop.xlane.xlu0 %1428
        %v1430 = vsub.f32 %v1422, %v1426
        %v1431 = vsub.f32 %v1423, %v1429
        %v1432 = vmul.f32 %v1430, 1.442695
        %v1433 = vpow.pop %v1432
        %v1434 = vmul.f32 %v1431, 1.442695
        %v1435 = vpow.pop %v1434
        %v1436 = vsel %vm1059, %v1433, 0.0
        %1437 = vadd.xlane.f32.xlu0 %v1436
        %v1438 = vpop.xlane.xlu0 %1437
        %v1439 = vsel %vm1059, %v1435, 0.0
        %1440 = vadd.xlane.f32.xlu0 %v1439
        %v1441 = vpop.xlane.xlu0 %1440
        %v1442 = vrcp.pop %v1438
        %v1443 = vrcp.pop %v1441
        %v1444 = vmul.f32 %v1433, %v1442
        %v1445 = vmul.f32 %v1435, %v1443
        %v1446 = vpack.c.bf16 %v1445, %v1444
        %1447 = vrot.lane.b32.xlu0 %v988, 64
        %v1448 = vpop.permute.xlu0 %1447
        %v1451 = vsel %vm1059, %v1446, 0
        %1453 = vmatprep.subr.bf16.mxu0 0
        %1454 = vmatpush1.bf16.msra.mxu0 %v1448
        %1455 = vmatprep.subr.bf16.mxu0 0
        %1456 = vmatpush1.bf16.msra.mxu0 0
        %1457 = vmatprep.subr.bf16.mxu0 0
        %1458 = vmatpush1.bf16.msra.mxu0 0
        %1459 = vmatprep.subr.bf16.mxu0 0
        %1460 = vmatpush1.bf16.msra.mxu0 0
        %1461 = vmatprep.subr.bf16.mxu0 0
        %1462 = vmatpush1.bf16.msra.mxu0 0
        %1463 = vmatprep.subr.bf16.mxu0 0
        %1464 = vmatpush1.bf16.msra.mxu0 0
        %1465 = vmatprep.subr.bf16.mxu0 0
        %1466 = vmatpush1.bf16.msra.mxu0 0
        %1467 = vmatprep.subr.bf16.mxu0 0
        %1468 = vmatpush1.bf16.msra.mxu0 0
        %1469 = vmatprep.subr.bf16.mxu0 0
        %1470 = vmatpush1.bf16.msra.mxu0 0
        %1471 = vmatprep.subr.bf16.mxu0 0
        %1472 = vmatpush1.bf16.msra.mxu0 0
        %1473 = vmatprep.subr.bf16.mxu0 0
        %1474 = vmatpush1.bf16.msra.mxu0 0
        %1475 = vmatprep.subr.bf16.mxu0 0
        %1476 = vmatpush1.bf16.msra.mxu0 0
        %1477 = vmatprep.subr.bf16.mxu0 0
        %1478 = vmatpush1.bf16.msra.mxu0 0
        %1479 = vmatprep.subr.bf16.mxu0 0
        %1480 = vmatpush1.bf16.msra.mxu0 0
        %1481 = vmatprep.subr.bf16.mxu0 0
        %1482 = vmatpush1.bf16.msra.mxu0 0
        %1483 = vmatprep.subr.bf16.mxu0 0
        %1484 = vmatpush1.bf16.msra.mxu0 0
        %1485 = vmatprep.mubr.bf16.mxu0 0
        %1486 = vmatmul.mubr.bf16.gmra.mrb[0].mxu0 %v1451
        %v1487 = vpop.f32.mrb[0].mxu0
        %v1488 = vadd.f32 0.0, %v1487
        %v1489 = vpop.f32.mrb[0].mxu0
        %v1490 = vpop.f32.mrb[0].mxu0
        %v1491 = vadd.f32 0.0, %v1490
        %v1492 = vpop.f32.mrb[0].mxu0
        %1493 = vdwg.mxu0
        %v1494 = vpack.c.bf16 %v1491, %v1488
        %v1499 = vunpack.c.l.b16 %v999
        %v1500 = vunpack.c.l.b16 %v1000
        %v1501 = vunpack.c.l.b16 %v1001
        %v1502 = vunpack.c.l.b16 %v1002
        %v1503 = vpack.c.b16 %v1500, %v1499
        %v1504 = vpack.c.b16 %v1502, %v1501
        %v1508 = vsel %vm1007, %v1494, 0
        %1510 = vmatprep.subr.bf16.mxu0 0
        %1511 = vmatpush1.bf16.msra.mxu0 %v1503
        %1512 = vmatprep.subr.bf16.mxu0 0
        %1513 = vmatpush1.bf16.msra.mxu0 %v1504
        %1514 = vmatprep.subr.bf16.mxu0 0
        %1515 = vmatpush1.bf16.msra.mxu0 0
        %1516 = vmatprep.subr.bf16.mxu0 0
        %1517 = vmatpush1.bf16.msra.mxu0 0
        %1518 = vmatprep.subr.bf16.mxu0 0
        %1519 = vmatpush1.bf16.msra.mxu0 0
        %1520 = vmatprep.subr.bf16.mxu0 0
        %1521 = vmatpush1.bf16.msra.mxu0 0
        %1522 = vmatprep.subr.bf16.mxu0 0
        %1523 = vmatpush1.bf16.msra.mxu0 0
        %1524 = vmatprep.subr.bf16.mxu0 0
        %1525 = vmatpush1.bf16.msra.mxu0 0
        %1526 = vmatprep.subr.bf16.mxu0 0
        %1527 = vmatpush1.bf16.msra.mxu0 0
        %1528 = vmatprep.subr.bf16.mxu0 0
        %1529 = vmatpush1.bf16.msra.mxu0 0
        %1530 = vmatprep.subr.bf16.mxu0 0
        %1531 = vmatpush1.bf16.msra.mxu0 0
        %1532 = vmatprep.subr.bf16.mxu0 0
        %1533 = vmatpush1.bf16.msra.mxu0 0
        %1534 = vmatprep.subr.bf16.mxu0 0
        %1535 = vmatpush1.bf16.msra.mxu0 0
        %1536 = vmatprep.subr.bf16.mxu0 0
        %1537 = vmatpush1.bf16.msra.mxu0 0
        %1538 = vmatprep.subr.bf16.mxu0 0
        %1539 = vmatpush1.bf16.msra.mxu0 0
        %1540 = vmatprep.subr.bf16.mxu0 0
        %1541 = vmatpush1.bf16.msra.mxu0 0
        %1542 = vmatprep.mubr.bf16.mxu0 0
        %1543 = vmatmul.mubr.bf16.gmra.mrb[0].mxu0 %v1508
        %v1544 = vpop.f32.mrb[0].mxu0
        %v1545 = vadd.f32 0.0, %v1544
        %v1546 = vpop.f32.mrb[0].mxu0
        %v1547 = vpop.f32.mrb[0].mxu0
        %v1548 = vadd.f32 0.0, %v1547
        %v1549 = vpop.f32.mrb[0].mxu0
        %1550 = vdwg.mxu0
        %v1551 = vadd.f32 %v1363, %v1545
        %v1552 = vadd.f32 %v1366, %v1548
        %1553 = vrot.lane.b32.xlu0 %v980, 32
        %v1554 = vpop.permute.xlu0 %1553
        %1555 = vrot.lane.b32.xlu0 %v987, 32
        %v1556 = vpop.permute.xlu0 %1555
        %v1558 = vsel %vm1007, %v1554, 0
        %v1561 = vsel %vm1007, %v1556, 0
        %1563 = vmatprep.subr.bf16.mxu0 0
        %1564 = vmatpush1.bf16.xpose.msra.mxu0 %v1561
        %1565 = vmatprep.subr.bf16.mxu0 0
        %1566 = vmatpush1.bf16.xpose.msra.mxu0 0
        %1567 = vmatprep.subr.bf16.mxu0 0
        %1568 = vmatpush1.bf16.xpose.msra.mxu0 0
        %1569 = vmatprep.subr.bf16.mxu0 0
        %1570 = vmatpush1.bf16.xpose.msra.mxu0 0
        %1571 = vmatprep.subr.bf16.mxu0 0
        %1572 = vmatpush1.bf16.xpose.msra.mxu0 0
        %1573 = vmatprep.subr.bf16.mxu0 0
        %1574 = vmatpush1.bf16.xpose.msra.mxu0 0
        %1575 = vmatprep.subr.bf16.mxu0 0
        %1576 = vmatpush1.bf16.xpose.msra.mxu0 0
        %1577 = vmatprep.subr.bf16.mxu0 0
        %1578 = vmatpush1.bf16.xpose.msra.mxu0 0
        %1579 = vmatprep.subr.bf16.mxu0 0
        %1580 = vmatpush1.bf16.xpose.msra.mxu0 0
        %1581 = vmatprep.subr.bf16.mxu0 0
        %1582 = vmatpush1.bf16.xpose.msra.mxu0 0
        %1583 = vmatprep.subr.bf16.mxu0 0
        %1584 = vmatpush1.bf16.xpose.msra.mxu0 0
        %1585 = vmatprep.subr.bf16.mxu0 0
        %1586 = vmatpush1.bf16.xpose.msra.mxu0 0
        %1587 = vmatprep.subr.bf16.mxu0 0
        %1588 = vmatpush1.bf16.xpose.msra.mxu0 0
        %1589 = vmatprep.subr.bf16.mxu0 0
        %1590 = vmatpush1.bf16.xpose.msra.mxu0 0
        %1591 = vmatprep.subr.bf16.mxu0 0
        %1592 = vmatpush1.bf16.xpose.msra.mxu0 0
        %1593 = vmatprep.subr.bf16.mxu0 0
        %1594 = vmatpush1.bf16.xpose.msra.mxu0 0
        %1595 = vmatprep.mubr.bf16.mxu0 0
        %1596 = vmatmul.mubr.bf16.gmra.mrb[0].mxu0 %v1558
        %v1597 = vpop.f32.mrb[0].mxu0
        %v1598 = vadd.f32 0.0, %v1597
        %v1599 = vpop.f32.mrb[0].mxu0
        %v1600 = vpop.f32.mrb[0].mxu0
        %v1601 = vadd.f32 0.0, %v1600
        %v1602 = vpop.f32.mrb[0].mxu0
        %1603 = vdwg.mxu0
        %v1604 = vmul.f32 %v1598, 0.17677669
        %v1605 = vmul.f32 %v1601, 0.17677669
        %v1606 = vadd.f32 %v1604, %v989
        %v1607 = vadd.f32 %v1605, %v990
        %v1608 = vsel %vm1059, %v1606, -inf
        %1609 = vmax.xlane.f32.xlu0 %v1608
        %v1610 = vpop.xlane.xlu0 %1609
        %v1611 = vsel %vm1059, %v1607, -inf
        %1612 = vmax.xlane.f32.xlu0 %v1611
        %v1613 = vpop.xlane.xlu0 %1612
        %v1614 = vsub.f32 %v1606, %v1610
        %v1615 = vsub.f32 %v1607, %v1613
        %v1616 = vmul.f32 %v1614, 1.442695
        %v1617 = vpow.pop %v1616
        %v1618 = vmul.f32 %v1615, 1.442695
        %v1619 = vpow.pop %v1618
        %v1620 = vsel %vm1059, %v1617, 0.0
        %1621 = vadd.xlane.f32.xlu0 %v1620
        %v1622 = vpop.xlane.xlu0 %1621
        %v1623 = vsel %vm1059, %v1619, 0.0
        %1624 = vadd.xlane.f32.xlu0 %v1623
        %v1625 = vpop.xlane.xlu0 %1624
        %v1626 = vrcp.pop %v1622
        %v1627 = vrcp.pop %v1625
        %v1628 = vmul.f32 %v1617, %v1626
        %v1629 = vmul.f32 %v1619, %v1627
        %v1630 = vpack.c.bf16 %v1629, %v1628
        %1631 = vrot.lane.b32.xlu0 %v988, 32
        %v1632 = vpop.permute.xlu0 %1631
        %v1635 = vsel %vm1059, %v1630, 0
        %1637 = vmatprep.subr.bf16.mxu0 0
        %1638 = vmatpush1.bf16.msra.mxu0 %v1632
        %1639 = vmatprep.subr.bf16.mxu0 0
        %1640 = vmatpush1.bf16.msra.mxu0 0
        %1641 = vmatprep.subr.bf16.mxu0 0
        %1642 = vmatpush1.bf16.msra.mxu0 0
        %1643 = vmatprep.subr.bf16.mxu0 0
        %1644 = vmatpush1.bf16.msra.mxu0 0
        %1645 = vmatprep.subr.bf16.mxu0 0
        %1646 = vmatpush1.bf16.msra.mxu0 0
        %1647 = vmatprep.subr.bf16.mxu0 0
        %1648 = vmatpush1.bf16.msra.mxu0 0
        %1649 = vmatprep.subr.bf16.mxu0 0
        %1650 = vmatpush1.bf16.msra.mxu0 0
        %1651 = vmatprep.subr.bf16.mxu0 0
        %1652 = vmatpush1.bf16.msra.mxu0 0
        %1653 = vmatprep.subr.bf16.mxu0 0
        %1654 = vmatpush1.bf16.msra.mxu0 0
        %1655 = vmatprep.subr.bf16.mxu0 0
        %1656 = vmatpush1.bf16.msra.mxu0 0
        %1657 = vmatprep.subr.bf16.mxu0 0
        %1658 = vmatpush1.bf16.msra.mxu0 0
        %1659 = vmatprep.subr.bf16.mxu0 0
        %1660 = vmatpush1.bf16.msra.mxu0 0
        %1661 = vmatprep.subr.bf16.mxu0 0
        %1662 = vmatpush1.bf16.msra.mxu0 0
        %1663 = vmatprep.subr.bf16.mxu0 0
        %1664 = vmatpush1.bf16.msra.mxu0 0
        %1665 = vmatprep.subr.bf16.mxu0 0
        %1666 = vmatpush1.bf16.msra.mxu0 0
        %1667 = vmatprep.subr.bf16.mxu0 0
        %1668 = vmatpush1.bf16.msra.mxu0 0
        %1669 = vmatprep.mubr.bf16.mxu0 0
        %1670 = vmatmul.mubr.bf16.gmra.mrb[0].mxu0 %v1635
        %v1671 = vpop.f32.mrb[0].mxu0
        %v1672 = vadd.f32 0.0, %v1671
        %v1673 = vpop.f32.mrb[0].mxu0
        %v1674 = vpop.f32.mrb[0].mxu0
        %v1675 = vadd.f32 0.0, %v1674
        %v1676 = vpop.f32.mrb[0].mxu0
        %1677 = vdwg.mxu0
        %v1678 = vpack.c.bf16 %v1675, %v1672
        %v1683 = vunpack.c.l.b16 %v1003
        %v1684 = vunpack.c.l.b16 %v1004
        %v1685 = vunpack.c.l.b16 %v1005
        %v1686 = vunpack.c.l.b16 %v1006
        %v1687 = vpack.c.b16 %v1684, %v1683
        %v1688 = vpack.c.b16 %v1686, %v1685
        %v1692 = vsel %vm1007, %v1678, 0
        %1694 = vmatprep.subr.bf16.mxu0 0
        %1695 = vmatpush1.bf16.msra.mxu0 %v1687
        %1696 = vmatprep.subr.bf16.mxu0 0
        %1697 = vmatpush1.bf16.msra.mxu0 %v1688
        %1698 = vmatprep.subr.bf16.mxu0 0
        %1699 = vmatpush1.bf16.msra.mxu0 0
        %1700 = vmatprep.subr.bf16.mxu0 0
        %1701 = vmatpush1.bf16.msra.mxu0 0
        %1702 = vmatprep.subr.bf16.mxu0 0
        %1703 = vmatpush1.bf16.msra.mxu0 0
        %1704 = vmatprep.subr.bf16.mxu0 0
        %1705 = vmatpush1.bf16.msra.mxu0 0
        %1706 = vmatprep.subr.bf16.mxu0 0
        %1707 = vmatpush1.bf16.msra.mxu0 0
        %1708 = vmatprep.subr.bf16.mxu0 0
        %1709 = vmatpush1.bf16.msra.mxu0 0
        %1710 = vmatprep.subr.bf16.mxu0 0
        %1711 = vmatpush1.bf16.msra.mxu0 0
        %1712 = vmatprep.subr.bf16.mxu0 0
        %1713 = vmatpush1.bf16.msra.mxu0 0
        %1714 = vmatprep.subr.bf16.mxu0 0
        %1715 = vmatpush1.bf16.msra.mxu0 0
        %1716 = vmatprep.subr.bf16.mxu0 0
        %1717 = vmatpush1.bf16.msra.mxu0 0
        %1718 = vmatprep.subr.bf16.mxu0 0
        %1719 = vmatpush1.bf16.msra.mxu0 0
        %1720 = vmatprep.subr.bf16.mxu0 0
        %1721 = vmatpush1.bf16.msra.mxu0 0
        %1722 = vmatprep.subr.bf16.mxu0 0
        %1723 = vmatpush1.bf16.msra.mxu0 0
        %1724 = vmatprep.subr.bf16.mxu0 0
        %1725 = vmatpush1.bf16.msra.mxu0 0
        %1726 = vmatprep.mubr.bf16.mxu0 0
        %1727 = vmatmul.mubr.bf16.gmra.mrb[0].mxu0 %v1692
        %v1728 = vpop.f32.mrb[0].mxu0
        %v1729 = vadd.f32 0.0, %v1728
        %v1730 = vpop.f32.mrb[0].mxu0
        %v1731 = vpop.f32.mrb[0].mxu0
        %v1732 = vadd.f32 0.0, %v1731
        %v1733 = vpop.f32.mrb[0].mxu0
        %1734 = vdwg.mxu0
        %v1735 = vadd.f32 %v1551, %v1729
        %v1736 = vadd.f32 %v1552, %v1732
        %v1737 = vpack.c.bf16 %v1736, %v1735
        %v1738 = vadd.bf16 %v559, %v1737
        %v1739 = vld [vmem:[%s539] sm:$0x1]
        %v1740 = vunpack.c.l.bf16 %v1738
        %v1741 = vunpack.c.h.bf16 %v1738
        %v1742 = vmul.f32 %v1740, %v1740
        %v1743 = vmul.f32 %v1741, %v1741
        %1744 = vadd.xlane.f32.xlu0 %v1742
        %v1745 = vpop.xlane.xlu0 %1744
        %1746 = vadd.xlane.f32.xlu0 %v1743
        %v1747 = vpop.xlane.xlu0 %1746
        %v1748 = vmul.f32 %v1745, %v569
        %v1749 = vmul.f32 %v1747, %v569
        %v1750 = vadd.f32 %v1748, 1e-05
        %v1751 = vadd.f32 %v1749, 1e-05
        %v1752 = vrsqrt.pop %v1750
        %v1753 = vrsqrt.pop %v1751
        %v1754 = vmul.f32 %v1740, %v1752
        %v1755 = vmul.f32 %v1741, %v1753
        %v1756 = vpack.c.bf16 %v1755, %v1754
        %v1758 = vpack.i.b16 %v1739, %v1739
        %v1760 = vlaneseq
        %v1761 = vshrl.u32 %v1760, 7
        %v1762 = vsub.s32 0, %v1761
        %v1763 = vrot.slane %v1758, %v1762
        %v1764 = vmul.bf16 %v1756, %v1763
        %v1765 = vld [vmem:[%s477] sm:$0xff]
        %v1766 = vld [vmem:[%s477 + $0x8] sm:$0xff]
        %v1767 = vld [vmem:[%s477 + $0x10] sm:$0xff]
        %v1768 = vld [vmem:[%s477 + $0x18] sm:$0xff]
        %v1769 = vld [vmem:[%s477 + $0x20] sm:$0xff]
        %v1770 = vld [vmem:[%s477 + $0x28] sm:$0xff]
        %v1771 = vld [vmem:[%s477 + $0x30] sm:$0xff]
        %v1772 = vld [vmem:[%s477 + $0x38] sm:$0xff]
        %v1773 = vld [vmem:[%s477 + $0x40] sm:$0xff]
        %v1774 = vld [vmem:[%s477 + $0x48] sm:$0xff]
        %v1775 = vld [vmem:[%s477 + $0x50] sm:$0xff]
        %v1776 = vld [vmem:[%s477 + $0x58] sm:$0xff]
        %v1777 = vld [vmem:[%s477 + $0x60] sm:$0xff]
        %v1778 = vld [vmem:[%s477 + $0x68] sm:$0xff]
        %v1779 = vld [vmem:[%s477 + $0x70] sm:$0xff]
        %v1780 = vld [vmem:[%s477 + $0x78] sm:$0xff]
        %v1781 = vld [vmem:[%s477 + $0x80] sm:$0xff]
        %v1782 = vld [vmem:[%s477 + $0x88] sm:$0xff]
        %v1783 = vld [vmem:[%s477 + $0x90] sm:$0xff]
        %v1784 = vld [vmem:[%s477 + $0x98] sm:$0xff]
        %v1785 = vld [vmem:[%s477 + $0xa0] sm:$0xff]
        %v1786 = vld [vmem:[%s477 + $0xa8] sm:$0xff]
        %v1787 = vld [vmem:[%s477 + $0xb0] sm:$0xff]
        %v1788 = vld [vmem:[%s477 + $0xb8] sm:$0xff]
        %v1789 = vld [vmem:[%s477 + $0xc0] sm:$0xff]
        %v1790 = vld [vmem:[%s477 + $0xc8] sm:$0xff]
        %v1791 = vld [vmem:[%s477 + $0xd0] sm:$0xff]
        %v1792 = vld [vmem:[%s477 + $0xd8] sm:$0xff]
        %v1793 = vld [vmem:[%s477 + $0xe0] sm:$0xff]
        %v1794 = vld [vmem:[%s477 + $0xe8] sm:$0xff]
        %v1795 = vld [vmem:[%s477 + $0xf0] sm:$0xff]
        %v1796 = vld [vmem:[%s477 + $0xf8] sm:$0xff]
        %v1829 = vunpack.c.l.b16 %v1765
        %v1830 = vunpack.c.h.b16 %v1765
        %v1831 = vunpack.c.l.b16 %v1766
        %v1832 = vunpack.c.h.b16 %v1766
        %v1833 = vunpack.c.l.b16 %v1767
        %v1834 = vunpack.c.h.b16 %v1767
        %v1835 = vunpack.c.l.b16 %v1768
        %v1836 = vunpack.c.h.b16 %v1768
        %v1837 = vunpack.c.l.b16 %v1769
        %v1838 = vunpack.c.h.b16 %v1769
        %v1839 = vunpack.c.l.b16 %v1770
        %v1840 = vunpack.c.h.b16 %v1770
        %v1841 = vunpack.c.l.b16 %v1771
        %v1842 = vunpack.c.h.b16 %v1771
        %v1843 = vunpack.c.l.b16 %v1772
        %v1844 = vunpack.c.h.b16 %v1772
        %v1845 = vunpack.c.l.b16 %v1773
        %v1846 = vunpack.c.h.b16 %v1773
        %v1847 = vunpack.c.l.b16 %v1774
        %v1848 = vunpack.c.h.b16 %v1774
        %v1849 = vunpack.c.l.b16 %v1775
        %v1850 = vunpack.c.h.b16 %v1775
        %v1851 = vunpack.c.l.b16 %v1776
        %v1852 = vunpack.c.h.b16 %v1776
        %v1853 = vunpack.c.l.b16 %v1777
        %v1854 = vunpack.c.h.b16 %v1777
        %v1855 = vunpack.c.l.b16 %v1778
        %v1856 = vunpack.c.h.b16 %v1778
        %v1857 = vunpack.c.l.b16 %v1779
        %v1858 = vunpack.c.h.b16 %v1779
        %v1859 = vunpack.c.l.b16 %v1780
        %v1860 = vunpack.c.h.b16 %v1780
        %v1861 = vunpack.c.l.b16 %v1781
        %v1862 = vunpack.c.h.b16 %v1781
        %v1863 = vunpack.c.l.b16 %v1782
        %v1864 = vunpack.c.h.b16 %v1782
        %v1865 = vunpack.c.l.b16 %v1783
        %v1866 = vunpack.c.h.b16 %v1783
        %v1867 = vunpack.c.l.b16 %v1784
        %v1868 = vunpack.c.h.b16 %v1784
        %v1869 = vunpack.c.l.b16 %v1785
        %v1870 = vunpack.c.h.b16 %v1785
        %v1871 = vunpack.c.l.b16 %v1786
        %v1872 = vunpack.c.h.b16 %v1786
        %v1873 = vunpack.c.l.b16 %v1787
        %v1874 = vunpack.c.h.b16 %v1787
        %v1875 = vunpack.c.l.b16 %v1788
        %v1876 = vunpack.c.h.b16 %v1788
        %v1877 = vunpack.c.l.b16 %v1789
        %v1878 = vunpack.c.h.b16 %v1789
        %v1879 = vunpack.c.l.b16 %v1790
        %v1880 = vunpack.c.h.b16 %v1790
        %v1881 = vunpack.c.l.b16 %v1791
        %v1882 = vunpack.c.h.b16 %v1791
        %v1883 = vunpack.c.l.b16 %v1792
        %v1884 = vunpack.c.h.b16 %v1792
        %v1885 = vunpack.c.l.b16 %v1793
        %v1886 = vunpack.c.h.b16 %v1793
        %v1887 = vunpack.c.l.b16 %v1794
        %v1888 = vunpack.c.h.b16 %v1794
        %v1889 = vunpack.c.l.b16 %v1795
        %v1890 = vunpack.c.h.b16 %v1795
        %v1891 = vunpack.c.l.b16 %v1796
        %v1892 = vunpack.c.h.b16 %v1796
        %v1893 = vpack.c.b16 %v1833, %v1829
        %v1894 = vpack.c.b16 %v1834, %v1830
        %v1895 = vpack.c.b16 %v1835, %v1831
        %v1896 = vpack.c.b16 %v1836, %v1832
        %v1897 = vpack.c.b16 %v1841, %v1837
        %v1898 = vpack.c.b16 %v1842, %v1838
        %v1899 = vpack.c.b16 %v1843, %v1839
        %v1900 = vpack.c.b16 %v1844, %v1840
        %v1901 = vpack.c.b16 %v1849, %v1845
        %v1902 = vpack.c.b16 %v1850, %v1846
        %v1903 = vpack.c.b16 %v1851, %v1847
        %v1904 = vpack.c.b16 %v1852, %v1848
        %v1905 = vpack.c.b16 %v1857, %v1853
        %v1906 = vpack.c.b16 %v1858, %v1854
        %v1907 = vpack.c.b16 %v1859, %v1855
        %v1908 = vpack.c.b16 %v1860, %v1856
        %v1909 = vpack.c.b16 %v1865, %v1861
        %v1910 = vpack.c.b16 %v1866, %v1862
        %v1911 = vpack.c.b16 %v1867, %v1863
        %v1912 = vpack.c.b16 %v1868, %v1864
        %v1913 = vpack.c.b16 %v1873, %v1869
        %v1914 = vpack.c.b16 %v1874, %v1870
        %v1915 = vpack.c.b16 %v1875, %v1871
        %v1916 = vpack.c.b16 %v1876, %v1872
        %v1917 = vpack.c.b16 %v1881, %v1877
        %v1918 = vpack.c.b16 %v1882, %v1878
        %v1919 = vpack.c.b16 %v1883, %v1879
        %v1920 = vpack.c.b16 %v1884, %v1880
        %v1921 = vpack.c.b16 %v1889, %v1885
        %v1922 = vpack.c.b16 %v1890, %v1886
        %v1923 = vpack.c.b16 %v1891, %v1887
        %v1924 = vpack.c.b16 %v1892, %v1888
        %1957 = vmatprep.subr.bf16.mxu0 %v1894
        %1958 = vmatpush1.bf16.msra.mxu0 %v1893
        %1959 = vmatprep.subr.bf16.mxu0 %v1898
        %1960 = vmatpush1.bf16.msra.mxu0 %v1897
        %1961 = vmatprep.subr.bf16.mxu0 %v1902
        %1962 = vmatpush1.bf16.msra.mxu0 %v1901
        %1963 = vmatprep.subr.bf16.mxu0 %v1906
        %1964 = vmatpush1.bf16.msra.mxu0 %v1905
        %1965 = vmatprep.subr.bf16.mxu0 %v1910
        %1966 = vmatpush1.bf16.msra.mxu0 %v1909
        %1967 = vmatprep.subr.bf16.mxu0 %v1914
        %1968 = vmatpush1.bf16.msra.mxu0 %v1913
        %1969 = vmatprep.subr.bf16.mxu0 %v1918
        %1970 = vmatpush1.bf16.msra.mxu0 %v1917
        %1971 = vmatprep.subr.bf16.mxu0 %v1922
        %1972 = vmatpush1.bf16.msra.mxu0 %v1921
        %1973 = vmatprep.subr.bf16.mxu0 0
        %1974 = vmatpush1.bf16.msra.mxu0 0
        %1975 = vmatprep.subr.bf16.mxu0 0
        %1976 = vmatpush1.bf16.msra.mxu0 0
        %1977 = vmatprep.subr.bf16.mxu0 0
        %1978 = vmatpush1.bf16.msra.mxu0 0
        %1979 = vmatprep.subr.bf16.mxu0 0
        %1980 = vmatpush1.bf16.msra.mxu0 0
        %1981 = vmatprep.subr.bf16.mxu0 0
        %1982 = vmatpush1.bf16.msra.mxu0 0
        %1983 = vmatprep.subr.bf16.mxu0 0
        %1984 = vmatpush1.bf16.msra.mxu0 0
        %1985 = vmatprep.subr.bf16.mxu0 0
        %1986 = vmatpush1.bf16.msra.mxu0 0
        %1987 = vmatprep.subr.bf16.mxu0 0
        %1988 = vmatpush1.bf16.msra.mxu0 0
        %1989 = vmatprep.mubr.bf16.mxu0 0
        %1990 = vmatmul.mubr.bf16.gmra.mrb[0].mxu0 %v1764
        %v1991 = vpop.f32.mrb[0].mxu0
        %v1992 = vadd.f32 0.0, %v1991
        %v1993 = vpop.f32.mrb[0].mxu0
        %v1994 = vadd.f32 0.0, %v1993
        %v1995 = vpop.f32.mrb[0].mxu0
        %v1996 = vadd.f32 0.0, %v1995
        %v1997 = vpop.f32.mrb[0].mxu0
        %v1998 = vadd.f32 0.0, %v1997
        %1999 = vdwg.mxu0
        %2000 = vmatprep.subr.bf16.mxu0 %v1896
        %2001 = vmatpush1.bf16.msra.mxu0 %v1895
        %2002 = vmatprep.subr.bf16.mxu0 %v1900
        %2003 = vmatpush1.bf16.msra.mxu0 %v1899
        %2004 = vmatprep.subr.bf16.mxu0 %v1904
        %2005 = vmatpush1.bf16.msra.mxu0 %v1903
        %2006 = vmatprep.subr.bf16.mxu0 %v1908
        %2007 = vmatpush1.bf16.msra.mxu0 %v1907
        %2008 = vmatprep.subr.bf16.mxu0 %v1912
        %2009 = vmatpush1.bf16.msra.mxu0 %v1911
        %2010 = vmatprep.subr.bf16.mxu0 %v1916
        %2011 = vmatpush1.bf16.msra.mxu0 %v1915
        %2012 = vmatprep.subr.bf16.mxu0 %v1920
        %2013 = vmatpush1.bf16.msra.mxu0 %v1919
        %2014 = vmatprep.subr.bf16.mxu0 %v1924
        %2015 = vmatpush1.bf16.msra.mxu0 %v1923
        %2016 = vmatprep.subr.bf16.mxu0 0
        %2017 = vmatpush1.bf16.msra.mxu0 0
        %2018 = vmatprep.subr.bf16.mxu0 0
        %2019 = vmatpush1.bf16.msra.mxu0 0
        %2020 = vmatprep.subr.bf16.mxu0 0
        %2021 = vmatpush1.bf16.msra.mxu0 0
        %2022 = vmatprep.subr.bf16.mxu0 0
        %2023 = vmatpush1.bf16.msra.mxu0 0
        %2024 = vmatprep.subr.bf16.mxu0 0
        %2025 = vmatpush1.bf16.msra.mxu0 0
        %2026 = vmatprep.subr.bf16.mxu0 0
        %2027 = vmatpush1.bf16.msra.mxu0 0
        %2028 = vmatprep.subr.bf16.mxu0 0
        %2029 = vmatpush1.bf16.msra.mxu0 0
        %2030 = vmatprep.subr.bf16.mxu0 0
        %2031 = vmatpush1.bf16.msra.mxu0 0
        %2032 = vmatprep.mubr.bf16.mxu0 0
        %2033 = vmatmul.mubr.bf16.gmra.mrb[0].mxu0 %v1764
        %v2034 = vpop.f32.mrb[0].mxu0
        %v2035 = vadd.f32 0.0, %v2034
        %v2036 = vpop.f32.mrb[0].mxu0
        %v2037 = vadd.f32 0.0, %v2036
        %v2038 = vpop.f32.mrb[0].mxu0
        %v2039 = vadd.f32 0.0, %v2038
        %v2040 = vpop.f32.mrb[0].mxu0
        %v2041 = vadd.f32 0.0, %v2040
        %2042 = vdwg.mxu0
        %v2043 = vsub.f32 0.0, %v1992
        %v2044 = vsub.f32 0.0, %v1994
        %v2045 = vsub.f32 0.0, %v1996
        %v2046 = vsub.f32 0.0, %v1998
        %v2047 = vmul.f32 %v2043, 1.442695
        %v2048 = vpow.pop %v2047
        %v2049 = vmul.f32 %v2044, 1.442695
        %v2050 = vpow.pop %v2049
        %v2051 = vmul.f32 %v2045, 1.442695
        %v2052 = vpow.pop %v2051
        %v2053 = vmul.f32 %v2046, 1.442695
        %v2054 = vpow.pop %v2053
        %v2055 = vadd.f32 %v2048, 1.0
        %v2056 = vadd.f32 %v2050, 1.0
        %v2057 = vadd.f32 %v2052, 1.0
        %v2058 = vadd.f32 %v2054, 1.0
        %v2059 = vrcp.pop %v2055
        %v2060 = vrcp.pop %v2056
        %v2061 = vrcp.pop %v2057
        %v2062 = vrcp.pop %v2058
        %v2063 = vmul.f32 %v1992, %v2059
        %v2064 = vmul.f32 %v1994, %v2060
        %v2065 = vmul.f32 %v1996, %v2061
        %v2066 = vmul.f32 %v1998, %v2062
        %v2067 = vmul.f32 %v2063, %v2035
        %v2068 = vmul.f32 %v2064, %v2037
        %v2069 = vmul.f32 %v2065, %v2039
        %v2070 = vmul.f32 %v2066, %v2041
        %v2071 = vpack.c.bf16 %v2069, %v2067
        %v2072 = vpack.c.bf16 %v2070, %v2068
        %v2073 = vld [vmem:[%s544] sm:$0xf]
        %v2074 = vld [vmem:[%s544 + $0x4] sm:$0xf]
        %v2075 = vld [vmem:[%s544 + $0x8] sm:$0xf]
        %v2076 = vld [vmem:[%s544 + $0xc] sm:$0xf]
        %v2077 = vld [vmem:[%s544 + $0x10] sm:$0xf]
        %v2078 = vld [vmem:[%s544 + $0x14] sm:$0xf]
        %v2079 = vld [vmem:[%s544 + $0x18] sm:$0xf]
        %v2080 = vld [vmem:[%s544 + $0x1c] sm:$0xf]
        %v2081 = vld [vmem:[%s544 + $0x20] sm:$0xf]
        %v2082 = vld [vmem:[%s544 + $0x24] sm:$0xf]
        %v2083 = vld [vmem:[%s544 + $0x28] sm:$0xf]
        %v2084 = vld [vmem:[%s544 + $0x2c] sm:$0xf]
        %v2085 = vld [vmem:[%s544 + $0x30] sm:$0xf]
        %v2086 = vld [vmem:[%s544 + $0x34] sm:$0xf]
        %v2087 = vld [vmem:[%s544 + $0x38] sm:$0xf]
        %v2088 = vld [vmem:[%s544 + $0x3c] sm:$0xf]
        %v2089 = vld [vmem:[%s544 + $0x40] sm:$0xf]
        %v2090 = vld [vmem:[%s544 + $0x44] sm:$0xf]
        %v2091 = vld [vmem:[%s544 + $0x48] sm:$0xf]
        %v2092 = vld [vmem:[%s544 + $0x4c] sm:$0xf]
        %v2093 = vld [vmem:[%s544 + $0x50] sm:$0xf]
        %v2094 = vld [vmem:[%s544 + $0x54] sm:$0xf]
        %v2095 = vld [vmem:[%s544 + $0x58] sm:$0xf]
        %v2096 = vld [vmem:[%s544 + $0x5c] sm:$0xf]
        %v2097 = vld [vmem:[%s544 + $0x60] sm:$0xf]
        %v2098 = vld [vmem:[%s544 + $0x64] sm:$0xf]
        %v2099 = vld [vmem:[%s544 + $0x68] sm:$0xf]
        %v2100 = vld [vmem:[%s544 + $0x6c] sm:$0xf]
        %v2101 = vld [vmem:[%s544 + $0x70] sm:$0xf]
        %v2102 = vld [vmem:[%s544 + $0x74] sm:$0xf]
        %v2103 = vld [vmem:[%s544 + $0x78] sm:$0xf]
        %v2104 = vld [vmem:[%s544 + $0x7c] sm:$0xf]
        %v2137 = vunpack.c.l.b16 %v2073
        %v2138 = vunpack.c.l.b16 %v2074
        %v2139 = vunpack.c.l.b16 %v2075
        %v2140 = vunpack.c.l.b16 %v2076
        %v2141 = vunpack.c.l.b16 %v2077
        %v2142 = vunpack.c.l.b16 %v2078
        %v2143 = vunpack.c.l.b16 %v2079
        %v2144 = vunpack.c.l.b16 %v2080
        %v2145 = vunpack.c.l.b16 %v2081
        %v2146 = vunpack.c.l.b16 %v2082
        %v2147 = vunpack.c.l.b16 %v2083
        %v2148 = vunpack.c.l.b16 %v2084
        %v2149 = vunpack.c.l.b16 %v2085
        %v2150 = vunpack.c.l.b16 %v2086
        %v2151 = vunpack.c.l.b16 %v2087
        %v2152 = vunpack.c.l.b16 %v2088
        %v2153 = vunpack.c.l.b16 %v2089
        %v2154 = vunpack.c.l.b16 %v2090
        %v2155 = vunpack.c.l.b16 %v2091
        %v2156 = vunpack.c.l.b16 %v2092
        %v2157 = vunpack.c.l.b16 %v2093
        %v2158 = vunpack.c.l.b16 %v2094
        %v2159 = vunpack.c.l.b16 %v2095
        %v2160 = vunpack.c.l.b16 %v2096
        %v2161 = vunpack.c.l.b16 %v2097
        %v2162 = vunpack.c.l.b16 %v2098
        %v2163 = vunpack.c.l.b16 %v2099
        %v2164 = vunpack.c.l.b16 %v2100
        %v2165 = vunpack.c.l.b16 %v2101
        %v2166 = vunpack.c.l.b16 %v2102
        %v2167 = vunpack.c.l.b16 %v2103
        %v2168 = vunpack.c.l.b16 %v2104
        %v2169 = vpack.c.b16 %v2138, %v2137
        %v2170 = vpack.c.b16 %v2140, %v2139
        %v2171 = vpack.c.b16 %v2142, %v2141
        %v2172 = vpack.c.b16 %v2144, %v2143
        %v2173 = vpack.c.b16 %v2146, %v2145
        %v2174 = vpack.c.b16 %v2148, %v2147
        %v2175 = vpack.c.b16 %v2150, %v2149
        %v2176 = vpack.c.b16 %v2152, %v2151
        %v2177 = vpack.c.b16 %v2154, %v2153
        %v2178 = vpack.c.b16 %v2156, %v2155
        %v2179 = vpack.c.b16 %v2158, %v2157
        %v2180 = vpack.c.b16 %v2160, %v2159
        %v2181 = vpack.c.b16 %v2162, %v2161
        %v2182 = vpack.c.b16 %v2164, %v2163
        %v2183 = vpack.c.b16 %v2166, %v2165
        %v2184 = vpack.c.b16 %v2168, %v2167
        %2201 = vmatprep.subr.bf16.mxu0 0
        %2202 = vmatpush1.bf16.msra.mxu0 %v2169
        %2203 = vmatprep.subr.bf16.mxu0 0
        %2204 = vmatpush1.bf16.msra.mxu0 %v2170
        %2205 = vmatprep.subr.bf16.mxu0 0
        %2206 = vmatpush1.bf16.msra.mxu0 %v2171
        %2207 = vmatprep.subr.bf16.mxu0 0
        %2208 = vmatpush1.bf16.msra.mxu0 %v2172
        %2209 = vmatprep.subr.bf16.mxu0 0
        %2210 = vmatpush1.bf16.msra.mxu0 %v2173
        %2211 = vmatprep.subr.bf16.mxu0 0
        %2212 = vmatpush1.bf16.msra.mxu0 %v2174
        %2213 = vmatprep.subr.bf16.mxu0 0
        %2214 = vmatpush1.bf16.msra.mxu0 %v2175
        %2215 = vmatprep.subr.bf16.mxu0 0
        %2216 = vmatpush1.bf16.msra.mxu0 %v2176
        %2217 = vmatprep.subr.bf16.mxu0 0
        %2218 = vmatpush1.bf16.msra.mxu0 %v2177
        %2219 = vmatprep.subr.bf16.mxu0 0
        %2220 = vmatpush1.bf16.msra.mxu0 %v2178
        %2221 = vmatprep.subr.bf16.mxu0 0
        %2222 = vmatpush1.bf16.msra.mxu0 %v2179
        %2223 = vmatprep.subr.bf16.mxu0 0
        %2224 = vmatpush1.bf16.msra.mxu0 %v2180
        %2225 = vmatprep.subr.bf16.mxu0 0
        %2226 = vmatpush1.bf16.msra.mxu0 %v2181
        %2227 = vmatprep.subr.bf16.mxu0 0
        %2228 = vmatpush1.bf16.msra.mxu0 %v2182
        %2229 = vmatprep.subr.bf16.mxu0 0
        %2230 = vmatpush1.bf16.msra.mxu0 %v2183
        %2231 = vmatprep.subr.bf16.mxu0 0
        %2232 = vmatpush1.bf16.msra.mxu0 %v2184
        %2233 = vmatprep.mubr.bf16.mxu0 %v2072
        %2234 = vmatmul.mubr.bf16.gmra.mrb[0].mxu0 %v2071
        %v2235 = vpop.f32.mrb[0].mxu0
        %v2236 = vadd.f32 0.0, %v2235
        %v2237 = vpop.f32.mrb[0].mxu0
        %v2238 = vpop.f32.mrb[0].mxu0
        %v2239 = vadd.f32 0.0, %v2238
        %v2240 = vpop.f32.mrb[0].mxu0
        %2241 = vdwg.mxu0
        %v2242 = vpack.c.bf16 %v2239, %v2236
        %v2243 = vadd.bf16 %v1738, %v2242
        %2244 = vst [vmem:[#allocation2] sm:$0xff] %v2243
        %p2245 = scmp.eq.s32.totalorder %s30, 1
        // Predicated region
        $region85: #{llama_forward.1} parent=67 // pred_check
          %p2246 = pneg %p2245
        $region86: #{llama_forward.1} parent=67 // pred_check_branch
          %2248 = sbr.rel (%p2246) target = $region88
        $region87: #{llama_forward.1} parent=67 // pred_region
          %v2249 = vld [vmem:[%s4] sm:$0x1]
          %v2250 = vunpack.c.l.bf16 %v2243
          %v2251 = vunpack.c.h.bf16 %v2243
          %v2252 = vmul.f32 %v2250, %v2250
          %v2253 = vmul.f32 %v2251, %v2251
          %2254 = vadd.xlane.f32.xlu0 %v2252
          %v2255 = vpop.xlane.xlu0 %2254
          %2256 = vadd.xlane.f32.xlu0 %v2253
          %v2257 = vpop.xlane.xlu0 %2256
          %v2258 = vmul.f32 %v2255, %v569
          %v2259 = vmul.f32 %v2257, %v569
          %v2260 = vadd.f32 %v2258, 1e-05
          %v2261 = vadd.f32 %v2259, 1e-05
          %v2262 = vrsqrt.pop %v2260
          %v2263 = vrsqrt.pop %v2261
          %v2264 = vmul.f32 %v2250, %v2262
          %v2265 = vmul.f32 %v2251, %v2263
          %v2266 = vpack.c.bf16 %v2265, %v2264
          %v2268 = vpack.i.b16 %v2249, %v2249
          %v2270 = vlaneseq
          %v2271 = vshrl.u32 %v2270, 7
          %v2272 = vsub.s32 0, %v2271
          %v2273 = vrot.slane %v2268, %v2272
          %v2274 = vmul.bf16 %v2266, %v2273
          %v2275 = vld [vmem:[%s5] sm:$0xff]
          %v2276 = vld [vmem:[%s5 + $0x8] sm:$0xff]
          %v2277 = vld [vmem:[%s5 + $0x10] sm:$0xff]
          %v2278 = vld [vmem:[%s5 + $0x18] sm:$0xff]
          %v2279 = vld [vmem:[%s5 + $0x20] sm:$0xff]
          %v2280 = vld [vmem:[%s5 + $0x28] sm:$0xff]
          %v2281 = vld [vmem:[%s5 + $0x30] sm:$0xff]
          %v2282 = vld [vmem:[%s5 + $0x38] sm:$0xff]
          %v2283 = vld [vmem:[%s5 + $0x40] sm:$0xff]
          %v2284 = vld [vmem:[%s5 + $0x48] sm:$0xff]
          %v2285 = vld [vmem:[%s5 + $0x50] sm:$0xff]
          %v2286 = vld [vmem:[%s5 + $0x58] sm:$0xff]
          %v2287 = vld [vmem:[%s5 + $0x60] sm:$0xff]
          %v2288 = vld [vmem:[%s5 + $0x68] sm:$0xff]
          %v2289 = vld [vmem:[%s5 + $0x70] sm:$0xff]
          %v2290 = vld [vmem:[%s5 + $0x78] sm:$0xff]
          %v2307 = vunpack.c.l.b16 %v2275
          %v2308 = vunpack.c.h.b16 %v2275
          %v2309 = vunpack.c.l.b16 %v2276
          %v2310 = vunpack.c.h.b16 %v2276
          %v2311 = vunpack.c.l.b16 %v2277
          %v2312 = vunpack.c.h.b16 %v2277
          %v2313 = vunpack.c.l.b16 %v2278
          %v2314 = vunpack.c.h.b16 %v2278
          %v2315 = vunpack.c.l.b16 %v2279
          %v2316 = vunpack.c.h.b16 %v2279
          %v2317 = vunpack.c.l.b16 %v2280
          %v2318 = vunpack.c.h.b16 %v2280
          %v2319 = vunpack.c.l.b16 %v2281
          %v2320 = vunpack.c.h.b16 %v2281
          %v2321 = vunpack.c.l.b16 %v2282
          %v2322 = vunpack.c.h.b16 %v2282
          %v2323 = vunpack.c.l.b16 %v2283
          %v2324 = vunpack.c.h.b16 %v2283
          %v2325 = vunpack.c.l.b16 %v2284
          %v2326 = vunpack.c.h.b16 %v2284
          %v2327 = vunpack.c.l.b16 %v2285
          %v2328 = vunpack.c.h.b16 %v2285
          %v2329 = vunpack.c.l.b16 %v2286
          %v2330 = vunpack.c.h.b16 %v2286
          %v2331 = vunpack.c.l.b16 %v2287
          %v2332 = vunpack.c.h.b16 %v2287
          %v2333 = vunpack.c.l.b16 %v2288
          %v2334 = vunpack.c.h.b16 %v2288
          %v2335 = vunpack.c.l.b16 %v2289
          %v2336 = vunpack.c.h.b16 %v2289
          %v2337 = vunpack.c.l.b16 %v2290
          %v2338 = vunpack.c.h.b16 %v2290
          %v2339 = vpack.c.b16 %v2309, %v2307
          %v2340 = vpack.c.b16 %v2310, %v2308
          %v2341 = vpack.c.b16 %v2313, %v2311
          %v2342 = vpack.c.b16 %v2314, %v2312
          %v2343 = vpack.c.b16 %v2317, %v2315
          %v2344 = vpack.c.b16 %v2318, %v2316
          %v2345 = vpack.c.b16 %v2321, %v2319
          %v2346 = vpack.c.b16 %v2322, %v2320
          %v2347 = vpack.c.b16 %v2325, %v2323
          %v2348 = vpack.c.b16 %v2326, %v2324
          %v2349 = vpack.c.b16 %v2329, %v2327
          %v2350 = vpack.c.b16 %v2330, %v2328
          %v2351 = vpack.c.b16 %v2333, %v2331
          %v2352 = vpack.c.b16 %v2334, %v2332
          %v2353 = vpack.c.b16 %v2337, %v2335
          %v2354 = vpack.c.b16 %v2338, %v2336
          %2371 = vmatprep.subr.bf16.mxu0 %v2340
          %2372 = vmatpush1.bf16.msra.mxu0 %v2339
          %2373 = vmatprep.subr.bf16.mxu0 %v2342
          %2374 = vmatpush1.bf16.msra.mxu0 %v2341
          %2375 = vmatprep.subr.bf16.mxu0 %v2344
          %2376 = vmatpush1.bf16.msra.mxu0 %v2343
          %2377 = vmatprep.subr.bf16.mxu0 %v2346
          %2378 = vmatpush1.bf16.msra.mxu0 %v2345
          %2379 = vmatprep.subr.bf16.mxu0 %v2348
          %2380 = vmatpush1.bf16.msra.mxu0 %v2347
          %2381 = vmatprep.subr.bf16.mxu0 %v2350
          %2382 = vmatpush1.bf16.msra.mxu0 %v2349
          %2383 = vmatprep.subr.bf16.mxu0 %v2352
          %2384 = vmatpush1.bf16.msra.mxu0 %v2351
          %2385 = vmatprep.subr.bf16.mxu0 %v2354
          %2386 = vmatpush1.bf16.msra.mxu0 %v2353
          %2387 = vmatprep.subr.bf16.mxu0 0
          %2388 = vmatpush1.bf16.msra.mxu0 0
          %2389 = vmatprep.subr.bf16.mxu0 0
          %2390 = vmatpush1.bf16.msra.mxu0 0
          %2391 = vmatprep.subr.bf16.mxu0 0
          %2392 = vmatpush1.bf16.msra.mxu0 0
          %2393 = vmatprep.subr.bf16.mxu0 0
          %2394 = vmatpush1.bf16.msra.mxu0 0
          %2395 = vmatprep.subr.bf16.mxu0 0
          %2396 = vmatpush1.bf16.msra.mxu0 0
          %2397 = vmatprep.subr.bf16.mxu0 0
          %2398 = vmatpush1.bf16.msra.mxu0 0
          %2399 = vmatprep.subr.bf16.mxu0 0
          %2400 = vmatpush1.bf16.msra.mxu0 0
          %2401 = vmatprep.subr.bf16.mxu0 0
          %2402 = vmatpush1.bf16.msra.mxu0 0
          %2403 = vmatprep.mubr.bf16.mxu0 0
          %2404 = vmatmul.mubr.bf16.gmra.mrb[0].mxu0 %v2274
          %v2405 = vpop.f32.mrb[0].mxu0
          %v2406 = vadd.f32 0.0, %v2405
          %v2407 = vpop.f32.mrb[0].mxu0
          %v2408 = vadd.f32 0.0, %v2407
          %v2409 = vpop.f32.mrb[0].mxu0
          %v2410 = vadd.f32 0.0, %v2409
          %v2411 = vpop.f32.mrb[0].mxu0
          %v2412 = vadd.f32 0.0, %v2411
          %2413 = vdwg.mxu0
          %2414 = vst [vmem:[#allocation9] sm:$0xff] %v2406
          %2415 = vst [vmem:[#allocation9 + $0x8] sm:$0xff] %v2408
          %2416 = vst [vmem:[#allocation9 + $0x10] sm:$0xff] %v2410
          %2417 = vst [vmem:[#allocation9 + $0x18] sm:$0xff] %v2412
        $region88: #{llama_forward.1} parent=67 // pred_fallthru
          _
        // Predicated region
        $region89: #{llama_forward.1} parent=67 // pred_check
          %p2418 = pneg %p325
        $region90: #{llama_forward.1} parent=67 // pred_check_branch
          %2420 = sbr.rel (%p2418) target = $region92
        $region91: #{llama_forward.1} parent=67 // pred_region
          %s2422 = ssub.s32 512, 512
          %2423 = vsyncadd [#allocation5], %s2422
          %s2424 = sshll.u32 [#allocation9], 4
          %s2425 = int_to_ptr.vmem [resolvable:$true] %s2424
          %2430 = dma.vmem_to_hbm [thread:$0]  %s2425, 512, %s12, [#allocation5], 256, 256, 16
        $region92: #{llama_forward.1} parent=67 // pred_fallthru
          _
        // Predicated region
        $region93: #{llama_forward.1} parent=67 // pred_check
          %p2431 = pneg %p325
        $region94: #{llama_forward.1} parent=67 // pred_check_branch
          %2433 = sbr.rel (%p2431) target = $region96
        $region95: #{llama_forward.1} parent=67 // pred_region
          %2434 = dma.done [#allocation5], 512
        $region96: #{llama_forward.1} parent=67 // pred_fallthru
          _
      $region68: #{llama_forward.1} parent=5 // pred_fallthru
        _
      %p2435 = scmp.le.s32.totalorder 2, %s25
      // Predicated region
      $region97: #{llama_forward.1} parent=5 // pred_check
        %p2436 = pneg %p2435
      $region98: #{llama_forward.1} parent=5 // pred_check_branch
        %2438 = sbr.rel (%p2436) target = $region100
      $region99: #{llama_forward.1} parent=5 // pred_region
        %s2439 = ssub.s32 %s25, 2
      $region100: #{llama_forward.1} parent=5 // pred_fallthru
        _
    $region6: #{llama_forward.1} parent=1 // loop_footer
      %s29 = sadd.s32 1, %s25
    $region7: #{llama_forward.1} parent=1 // loop_footer_branch
      %24 = sbr.rel target = $region3
    $region8: #{llama_forward.1} parent=1 // loop_exit
      _
    %2440 = vsyncpa [#allocation4], 1
    %s2441 = scalar_lea.sflag [#allocation4], 1
    %2442 = vsyncpa %s2441, 1
    %2443 = vsyncpa [#allocation7], 1
    %s2444 = scalar_lea.sflag [#allocation7], 1
    %2445 = vsyncpa %s2444, 1
    %2446 = vsyncpa [#allocation5], 1
    %s2447 = scalar_lea.sflag [#allocation5], 1
    %2448 = vsyncpa %s2447, 1

</llo_original>
